<compile_context>
chip_gen: v7x
topology: tpu7x:2x2x1
jax: 0.10.0
libtpu: 0.0.40
codegen_flags: <defaults>
</compile_context>

<pallas_src>
import functools
import math

import jax
import jax.numpy as jnp
from jax import lax
from jax.experimental import pallas as pl
from jax.experimental.pallas import tpu as pltpu


def encoder_layer_kernel(x_ref, wqkv_ref, wo_ref, gamma_ref, beta_ref,
                         wl_ref, bl_ref, o_ref, *, nhead, eps):
    x = x_ref[0]                              # (S, D) current batch element
    S, D = x.shape
    dk = D // nhead

    # Fused Q/K/V projection: one (S,D)x(D,3D) MXU op instead of three
    # (S,D)x(D,D) ops.  The 1/sqrt(dk) attention scale is already folded into
    # the Q columns of wqkv (no softmax => mathematically identical).
    qkv = jnp.dot(x, wqkv_ref[...], preferred_element_type=jnp.float32)   # (S, 3D)

    # Per-head scaled dot-product "attention" (NO softmax in the reference),
    # with the output projection accumulated per head -- no concatenate, no
    # explicit transpose (dot_general contracts the last dims directly).
    y = jnp.zeros((S, D), jnp.float32)
    for h in range(nhead):                    # static python loop, nhead is tiny
        qh = qkv[:, h * dk:(h + 1) * dk]                       # (S, dk)
        kh = qkv[:, D + h * dk:D + (h + 1) * dk]               # (S, dk)
        vh = qkv[:, 2 * D + h * dk:2 * D + (h + 1) * dk]       # (S, dk)
        scores = lax.dot_general(qh, kh, (((1,), (1,)), ((), ())),
                                 preferred_element_type=jnp.float32)      # (S, S)
        ctx = jnp.dot(scores, vh, preferred_element_type=jnp.float32)     # (S, dk)
        # Static sublane slice of wo is a cheap ref view; accumulating here
        # replaces the concat + one big wo matmul of the previous version.
        y = y + jnp.dot(ctx, wo_ref[h * dk:(h + 1) * dk, :],
                        preferred_element_type=jnp.float32)               # (S, D)

    # LayerNorm over last dim (biased variance), eps inside rsqrt.
    mean = jnp.mean(y, axis=-1, keepdims=True)
    var = jnp.mean((y - mean) ** 2, axis=-1, keepdims=True)
    y_ln = (y - mean) * lax.rsqrt(var + eps)
    y_ln = y_ln * gamma_ref[...] + beta_ref[...]

    # Final feed-forward linear (with bias).
    out = jnp.dot(y_ln, wl_ref[...], preferred_element_type=jnp.float32) + bl_ref[...]
    o_ref[0] = out.astype(o_ref.dtype)


def transformer_encoder_layer(x, params, *, nhead, eps=1e-5):
    B, S, D = x.shape
    dk = D // nhead
    scale = 1.0 / math.sqrt(dk)

    # Parameter prep (outside the kernel, constant-folds under jit):
    # fuse Q/K/V weights into one (D, 3D) matrix and fold the score scale
    # into the Q columns.
    wqkv = jnp.concatenate(
        [params['wq'] * scale, params['wk'], params['wv']], axis=1)

    kernel = functools.partial(encoder_layer_kernel, nhead=nhead, eps=eps)
    return pl.pallas_call(
        kernel,
        out_shape=jax.ShapeDtypeStruct((B, S, D), x.dtype),
        grid=(B,),
        in_specs=[
            pl.BlockSpec((1, S, D), lambda b: (b, 0, 0)),    # x
            pl.BlockSpec((D, 3 * D), lambda b: (0, 0)),      # fused wqkv (scale folded)
            pl.BlockSpec((D, D), lambda b: (0, 0)),          # wo
            pl.BlockSpec((1, D), lambda b: (0, 0)),          # gamma
            pl.BlockSpec((1, D), lambda b: (0, 0)),          # beta
            pl.BlockSpec((D, D), lambda b: (0, 0)),          # wl
            pl.BlockSpec((1, D), lambda b: (0, 0)),          # bl
        ],
        out_specs=pl.BlockSpec((1, S, D), lambda b: (b, 0, 0)),
        compiler_params=pltpu.CompilerParams(
            dimension_semantics=("parallel",),   # 2-wide parallel axis -> both TCs on v7x
            vmem_limit_bytes=32 * 1024 * 1024,
        ),
    )(x, wqkv, params['wo'], params['gamma'], params['beta'],
      params['wl'], params['bl'])


def reference(x, p, *, nhead, eps=1e-5):
    """Pure-JAX reference matching the PyTorch forward exactly (unfused weights)."""
    B, S, D = x.shape
    dk = D // nhead
    q = x @ p['wq']
    k = x @ p['wk']
    v = x @ p['wv']
    qh = q.reshape(B, S, nhead, dk).transpose(0, 2, 1, 3)
    kh = k.reshape(B, S, nhead, dk).transpose(0, 2, 1, 3)
    vh = v.reshape(B, S, nhead, dk).transpose(0, 2, 1, 3)
    scores = jnp.einsum('bhqd,bhkd->bhqk', qh, kh) / math.sqrt(dk)
    y = jnp.einsum('bhqk,bhkd->bhqd', scores, vh)
    y = y.transpose(0, 2, 1, 3).reshape(B, S, D)
    y = y @ p['wo']
    mean = y.mean(-1, keepdims=True)
    var = ((y - mean) ** 2).mean(-1, keepdims=True)
    y_ln = (y - mean) / jnp.sqrt(var + eps) * p['gamma'] + p['beta']
    return y_ln @ p['wl'] + p['bl']


if __name__ == "__main__":
    B, S, D, NHEAD = 2, 8, 32, 4     # d_model=32, nhead=4
    key = jax.random.PRNGKey(0)
    keys = jax.random.split(key, 10)

    bound = 1.0 / math.sqrt(D)       # ~kaiming-uniform style scale for Linear(D, D)
    params = {
        'wq': jax.random.uniform(keys[0], (D, D), jnp.float32, -bound, bound),
        'wk': jax.random.uniform(keys[1], (D, D), jnp.float32, -bound, bound),
        'wv': jax.random.uniform(keys[2], (D, D), jnp.float32, -bound, bound),
        'wo': jax.random.uniform(keys[3], (D, D), jnp.float32, -bound, bound),
        # LayerNorm affine params (random to make the check meaningful)
        'gamma': 1.0 + 0.1 * jax.random.normal(keys[4], (1, D), jnp.float32),
        'beta': 0.1 * jax.random.normal(keys[5], (1, D), jnp.float32),
        # final Linear with bias
        'wl': jax.random.uniform(keys[6], (D, D), jnp.float32, -bound, bound),
        'bl': jax.random.uniform(keys[7], (1, D), jnp.float32, -bound, bound),
    }

    x = jax.random.normal(keys[8], (B, S, D), jnp.float32)

    out = transformer_encoder_layer(x, params, nhead=NHEAD)
    out = jax.block_until_ready(out)

    ref = reference(x, params, nhead=NHEAD)
    assert out.shape == (B, S, D)
    assert jnp.allclose(out, ref, atol=1e-4, rtol=1e-4), \
        f"mismatch: max abs err {jnp.max(jnp.abs(out - ref))}"

    print("KERNEL_OK")
</pallas_src>

<mosaic_0001>
module attributes {stable_mosaic.version = 11 : i64} {
  func.func @encoder_layer_kernel(%arg0: i32, %arg1: memref<1x8x32xf32, #tpu.memory_space<vmem>>, %arg2: memref<32x96xf32, #tpu.memory_space<vmem>>, %arg3: memref<32x32xf32, #tpu.memory_space<vmem>>, %arg4: memref<1x32xf32, #tpu.memory_space<vmem>>, %arg5: memref<1x32xf32, #tpu.memory_space<vmem>>, %arg6: memref<32x32xf32, #tpu.memory_space<vmem>>, %arg7: memref<1x32xf32, #tpu.memory_space<vmem>>, %arg8: memref<1x8x32xf32, #tpu.memory_space<vmem>>) attributes {dimension_semantics = [#tpu.dimension_semantics<parallel>], iteration_bounds = array<i64: 2>, scalar_prefetch = 0 : i64, scratch_operands = 0 : i64, tpu.core_type = #tpu.core_type<tc>, window_params = [{transform_indices = @transform_0, window_bounds = array<i64: 1, 8, 32>}, {pipeline_mode = #tpu.pipeline_mode<synchronous>, transform_indices = @transform_1, window_bounds = array<i64: 32, 96>}, {pipeline_mode = #tpu.pipeline_mode<synchronous>, transform_indices = @transform_2, window_bounds = array<i64: 32, 32>}, {pipeline_mode = #tpu.pipeline_mode<synchronous>, transform_indices = @transform_3, window_bounds = array<i64: 1, 32>}, {pipeline_mode = #tpu.pipeline_mode<synchronous>, transform_indices = @transform_4, window_bounds = array<i64: 1, 32>}, {pipeline_mode = #tpu.pipeline_mode<synchronous>, transform_indices = @transform_5, window_bounds = array<i64: 32, 32>}, {pipeline_mode = #tpu.pipeline_mode<synchronous>, transform_indices = @transform_6, window_bounds = array<i64: 1, 32>}, {transform_indices = @transform_7, window_bounds = array<i64: 1, 8, 32>}]} {
    %c0 = arith.constant 0 : index
    %c0_0 = arith.constant 0 : index
    %c0_1 = arith.constant 0 : index
    %0 = vector.load %arg1[%c0, %c0_0, %c0_1] : memref<1x8x32xf32, #tpu.memory_space<vmem>>, vector<1x8x32xf32>
    %1 = vector.shape_cast %0 : vector<1x8x32xf32> to vector<8x32xf32>
    %c0_2 = arith.constant 0 : index
    %c0_3 = arith.constant 0 : index
    %2 = vector.load %arg2[%c0_2, %c0_3] : memref<32x96xf32, #tpu.memory_space<vmem>>, vector<32x96xf32>
    %cst = arith.constant dense<0.000000e+00> : vector<8x96xf32>
    %3 = tpu.matmul %1, %2, %cst {dimension_numbers = #tpu.dot_dimension_numbers<[1], [0], [0], [1], [0, 0, 1, 1], [], []>} : vector<8x32xf32>, vector<32x96xf32>, vector<8x96xf32> -> vector<8x96xf32>
    %cst_4 = arith.constant 0.000000e+00 : f32
    %4 = vector.broadcast %cst_4 : f32 to vector<8x32xf32>
    %5 = vector.extract_strided_slice %3 {offsets = [0, 0], sizes = [8, 8], strides = [1, 1]} : vector<8x96xf32> to vector<8x8xf32>
    %6 = vector.extract_strided_slice %3 {offsets = [0, 32], sizes = [8, 8], strides = [1, 1]} : vector<8x96xf32> to vector<8x8xf32>
    %7 = vector.extract_strided_slice %3 {offsets = [0, 64], sizes = [8, 8], strides = [1, 1]} : vector<8x96xf32> to vector<8x8xf32>
    %cst_5 = arith.constant dense<0.000000e+00> : vector<8x8xf32>
    %8 = tpu.matmul %5, %6, %cst_5 {dimension_numbers = #tpu.dot_dimension_numbers<[1], [1], [0], [0], [0, 0, 1, 0], [], []>} : vector<8x8xf32>, vector<8x8xf32>, vector<8x8xf32> -> vector<8x8xf32>
    %cst_6 = arith.constant dense<0.000000e+00> : vector<8x8xf32>
    %9 = tpu.matmul %8, %7, %cst_6 {dimension_numbers = #tpu.dot_dimension_numbers<[1], [0], [0], [1], [0, 0, 1, 1], [], []>} : vector<8x8xf32>, vector<8x8xf32>, vector<8x8xf32> -> vector<8x8xf32>
    %c0_7 = arith.constant 0 : index
    %c0_8 = arith.constant 0 : index
    %10 = vector.load %arg3[%c0_7, %c0_8] : memref<32x32xf32, #tpu.memory_space<vmem>>, vector<8x32xf32>
    %cst_9 = arith.constant dense<0.000000e+00> : vector<8x32xf32>
    %11 = tpu.matmul %9, %10, %cst_9 {dimension_numbers = #tpu.dot_dimension_numbers<[1], [0], [0], [1], [0, 0, 1, 1], [], []>} : vector<8x8xf32>, vector<8x32xf32>, vector<8x32xf32> -> vector<8x32xf32>
    %12 = arith.addf %4, %11 : vector<8x32xf32>
    %13 = vector.extract_strided_slice %3 {offsets = [0, 8], sizes = [8, 8], strides = [1, 1]} : vector<8x96xf32> to vector<8x8xf32>
    %14 = vector.extract_strided_slice %3 {offsets = [0, 40], sizes = [8, 8], strides = [1, 1]} : vector<8x96xf32> to vector<8x8xf32>
    %15 = vector.extract_strided_slice %3 {offsets = [0, 72], sizes = [8, 8], strides = [1, 1]} : vector<8x96xf32> to vector<8x8xf32>
    %cst_10 = arith.constant dense<0.000000e+00> : vector<8x8xf32>
    %16 = tpu.matmul %13, %14, %cst_10 {dimension_numbers = #tpu.dot_dimension_numbers<[1], [1], [0], [0], [0, 0, 1, 0], [], []>} : vector<8x8xf32>, vector<8x8xf32>, vector<8x8xf32> -> vector<8x8xf32>
    %cst_11 = arith.constant dense<0.000000e+00> : vector<8x8xf32>
    %17 = tpu.matmul %16, %15, %cst_11 {dimension_numbers = #tpu.dot_dimension_numbers<[1], [0], [0], [1], [0, 0, 1, 1], [], []>} : vector<8x8xf32>, vector<8x8xf32>, vector<8x8xf32> -> vector<8x8xf32>
    %c8 = arith.constant 8 : index
    %c0_12 = arith.constant 0 : index
    %18 = vector.load %arg3[%c8, %c0_12] : memref<32x32xf32, #tpu.memory_space<vmem>>, vector<8x32xf32>
    %cst_13 = arith.constant dense<0.000000e+00> : vector<8x32xf32>
    %19 = tpu.matmul %17, %18, %cst_13 {dimension_numbers = #tpu.dot_dimension_numbers<[1], [0], [0], [1], [0, 0, 1, 1], [], []>} : vector<8x8xf32>, vector<8x32xf32>, vector<8x32xf32> -> vector<8x32xf32>
    %20 = arith.addf %12, %19 : vector<8x32xf32>
    %21 = vector.extract_strided_slice %3 {offsets = [0, 16], sizes = [8, 8], strides = [1, 1]} : vector<8x96xf32> to vector<8x8xf32>
    %22 = vector.extract_strided_slice %3 {offsets = [0, 48], sizes = [8, 8], strides = [1, 1]} : vector<8x96xf32> to vector<8x8xf32>
    %23 = vector.extract_strided_slice %3 {offsets = [0, 80], sizes = [8, 8], strides = [1, 1]} : vector<8x96xf32> to vector<8x8xf32>
    %cst_14 = arith.constant dense<0.000000e+00> : vector<8x8xf32>
    %24 = tpu.matmul %21, %22, %cst_14 {dimension_numbers = #tpu.dot_dimension_numbers<[1], [1], [0], [0], [0, 0, 1, 0], [], []>} : vector<8x8xf32>, vector<8x8xf32>, vector<8x8xf32> -> vector<8x8xf32>
    %cst_15 = arith.constant dense<0.000000e+00> : vector<8x8xf32>
    %25 = tpu.matmul %24, %23, %cst_15 {dimension_numbers = #tpu.dot_dimension_numbers<[1], [0], [0], [1], [0, 0, 1, 1], [], []>} : vector<8x8xf32>, vector<8x8xf32>, vector<8x8xf32> -> vector<8x8xf32>
    %c16 = arith.constant 16 : index
    %c0_16 = arith.constant 0 : index
    %26 = vector.load %arg3[%c16, %c0_16] : memref<32x32xf32, #tpu.memory_space<vmem>>, vector<8x32xf32>
    %cst_17 = arith.constant dense<0.000000e+00> : vector<8x32xf32>
    %27 = tpu.matmul %25, %26, %cst_17 {dimension_numbers = #tpu.dot_dimension_numbers<[1], [0], [0], [1], [0, 0, 1, 1], [], []>} : vector<8x8xf32>, vector<8x32xf32>, vector<8x32xf32> -> vector<8x32xf32>
    %28 = arith.addf %20, %27 : vector<8x32xf32>
    %29 = vector.extract_strided_slice %3 {offsets = [0, 24], sizes = [8, 8], strides = [1, 1]} : vector<8x96xf32> to vector<8x8xf32>
    %30 = vector.extract_strided_slice %3 {offsets = [0, 56], sizes = [8, 8], strides = [1, 1]} : vector<8x96xf32> to vector<8x8xf32>
    %31 = vector.extract_strided_slice %3 {offsets = [0, 88], sizes = [8, 8], strides = [1, 1]} : vector<8x96xf32> to vector<8x8xf32>
    %cst_18 = arith.constant dense<0.000000e+00> : vector<8x8xf32>
    %32 = tpu.matmul %29, %30, %cst_18 {dimension_numbers = #tpu.dot_dimension_numbers<[1], [1], [0], [0], [0, 0, 1, 0], [], []>} : vector<8x8xf32>, vector<8x8xf32>, vector<8x8xf32> -> vector<8x8xf32>
    %cst_19 = arith.constant dense<0.000000e+00> : vector<8x8xf32>
    %33 = tpu.matmul %32, %31, %cst_19 {dimension_numbers = #tpu.dot_dimension_numbers<[1], [0], [0], [1], [0, 0, 1, 1], [], []>} : vector<8x8xf32>, vector<8x8xf32>, vector<8x8xf32> -> vector<8x8xf32>
    %c24 = arith.constant 24 : index
    %c0_20 = arith.constant 0 : index
    %34 = vector.load %arg3[%c24, %c0_20] : memref<32x32xf32, #tpu.memory_space<vmem>>, vector<8x32xf32>
    %cst_21 = arith.constant dense<0.000000e+00> : vector<8x32xf32>
    %35 = tpu.matmul %33, %34, %cst_21 {dimension_numbers = #tpu.dot_dimension_numbers<[1], [0], [0], [1], [0, 0, 1, 1], [], []>} : vector<8x8xf32>, vector<8x32xf32>, vector<8x32xf32> -> vector<8x32xf32>
    %36 = arith.addf %28, %35 : vector<8x32xf32>
    %cst_22 = arith.constant dense<0.000000e+00> : vector<8xf32>
    %37 = vector.multi_reduction <add>, %36, %cst_22 [1] : vector<8x32xf32> to vector<8xf32>
    %38 = vector.shape_cast %37 : vector<8xf32> to vector<8x1xf32>
    %cst_23 = arith.constant 3.200000e+01 : f32
    %39 = vector.broadcast %cst_23 : f32 to vector<8x1xf32>
    %40 = arith.divf %38, %39 : vector<8x1xf32>
    %41 = vector.broadcast %40 : vector<8x1xf32> to vector<8x32xf32>
    %42 = arith.subf %36, %41 : vector<8x32xf32>
    %43 = arith.mulf %42, %42 : vector<8x32xf32>
    %cst_24 = arith.constant dense<0.000000e+00> : vector<8xf32>
    %44 = vector.multi_reduction <add>, %43, %cst_24 [1] : vector<8x32xf32> to vector<8xf32>
    %45 = vector.shape_cast %44 : vector<8xf32> to vector<8x1xf32>
    %cst_25 = arith.constant 3.200000e+01 : f32
    %46 = vector.broadcast %cst_25 : f32 to vector<8x1xf32>
    %47 = arith.divf %45, %46 : vector<8x1xf32>
    %48 = vector.broadcast %40 : vector<8x1xf32> to vector<8x32xf32>
    %49 = arith.subf %36, %48 : vector<8x32xf32>
    %cst_26 = arith.constant 9.99999974E-6 : f32
    %50 = vector.broadcast %cst_26 : f32 to vector<8x1xf32>
    %51 = arith.addf %47, %50 : vector<8x1xf32>
    %52 = math.rsqrt %51 : vector<8x1xf32>
    %53 = vector.broadcast %52 : vector<8x1xf32> to vector<8x32xf32>
    %54 = arith.mulf %49, %53 : vector<8x32xf32>
    %c0_27 = arith.constant 0 : index
    %c0_28 = arith.constant 0 : index
    %55 = vector.load %arg4[%c0_27, %c0_28] : memref<1x32xf32, #tpu.memory_space<vmem>>, vector<1x32xf32>
    %56 = vector.broadcast %55 : vector<1x32xf32> to vector<8x32xf32>
    %57 = arith.mulf %54, %56 : vector<8x32xf32>
    %c0_29 = arith.constant 0 : index
    %c0_30 = arith.constant 0 : index
    %58 = vector.load %arg5[%c0_29, %c0_30] : memref<1x32xf32, #tpu.memory_space<vmem>>, vector<1x32xf32>
    %59 = vector.broadcast %58 : vector<1x32xf32> to vector<8x32xf32>
    %60 = arith.addf %57, %59 : vector<8x32xf32>
    %c0_31 = arith.constant 0 : index
    %c0_32 = arith.constant 0 : index
    %61 = vector.load %arg6[%c0_31, %c0_32] : memref<32x32xf32, #tpu.memory_space<vmem>>, vector<32x32xf32>
    %cst_33 = arith.constant dense<0.000000e+00> : vector<8x32xf32>
    %62 = tpu.matmul %60, %61, %cst_33 {dimension_numbers = #tpu.dot_dimension_numbers<[1], [0], [0], [1], [0, 0, 1, 1], [], []>} : vector<8x32xf32>, vector<32x32xf32>, vector<8x32xf32> -> vector<8x32xf32>
    %c0_34 = arith.constant 0 : index
    %c0_35 = arith.constant 0 : index
    %63 = vector.load %arg7[%c0_34, %c0_35] : memref<1x32xf32, #tpu.memory_space<vmem>>, vector<1x32xf32>
    %64 = vector.broadcast %63 : vector<1x32xf32> to vector<8x32xf32>
    %65 = arith.addf %62, %64 : vector<8x32xf32>
    %c0_36 = arith.constant 0 : index
    %c0_37 = arith.constant 0 : index
    %c0_38 = arith.constant 0 : index
    %66 = vector.load %arg8[%c0_36, %c0_37, %c0_38] : memref<1x8x32xf32, #tpu.memory_space<vmem>>, vector<1x8x32xf32>
    %67 = vector.shape_cast %66 : vector<1x8x32xf32> to vector<8x32xf32>
    %68 = vector.shape_cast %65 : vector<8x32xf32> to vector<1x8x32xf32>
    tpu.vector_store %arg8[%c0_36, %c0_37, %c0_38], %68 {strides = array<i32>} : memref<1x8x32xf32, #tpu.memory_space<vmem>>, vector<1x8x32xf32>,
    return
  }
  func.func @transform_0(%arg0: i32) -> (i32, i32, i32) {
    %c0_i32 = arith.constant 0 : i32
    %c0_i32_0 = arith.constant 0 : i32
    %c0_i32_1 = arith.constant 0 : i32
    return %arg0, %c0_i32, %c0_i32_0 : i32, i32, i32
  }
  func.func @transform_1(%arg0: i32) -> (i32, i32) {
    %c0_i32 = arith.constant 0 : i32
    %c0_i32_0 = arith.constant 0 : i32
    %c0_i32_1 = arith.constant 0 : i32
    return %c0_i32, %c0_i32_0 : i32, i32
  }
  func.func @transform_2(%arg0: i32) -> (i32, i32) {
    %c0_i32 = arith.constant 0 : i32
    %c0_i32_0 = arith.constant 0 : i32
    %c0_i32_1 = arith.constant 0 : i32
    return %c0_i32, %c0_i32_0 : i32, i32
  }
  func.func @transform_3(%arg0: i32) -> (i32, i32) {
    %c0_i32 = arith.constant 0 : i32
    %c0_i32_0 = arith.constant 0 : i32
    %c0_i32_1 = arith.constant 0 : i32
    return %c0_i32, %c0_i32_0 : i32, i32
  }
  func.func @transform_4(%arg0: i32) -> (i32, i32) {
    %c0_i32 = arith.constant 0 : i32
    %c0_i32_0 = arith.constant 0 : i32
    %c0_i32_1 = arith.constant 0 : i32
    return %c0_i32, %c0_i32_0 : i32, i32
  }
  func.func @transform_5(%arg0: i32) -> (i32, i32) {
    %c0_i32 = arith.constant 0 : i32
    %c0_i32_0 = arith.constant 0 : i32
    %c0_i32_1 = arith.constant 0 : i32
    return %c0_i32, %c0_i32_0 : i32, i32
  }
  func.func @transform_6(%arg0: i32) -> (i32, i32) {
    %c0_i32 = arith.constant 0 : i32
    %c0_i32_0 = arith.constant 0 : i32
    %c0_i32_1 = arith.constant 0 : i32
    return %c0_i32, %c0_i32_0 : i32, i32
  }
  func.func @transform_7(%arg0: i32) -> (i32, i32, i32) {
    %c0_i32 = arith.constant 0 : i32
    %c0_i32_0 = arith.constant 0 : i32
    %c0_i32_1 = arith.constant 0 : i32
    return %arg0, %c0_i32, %c0_i32_0 : i32, i32, i32
  }
}

</mosaic_0001>

<llo_original>
// kernel: tpu_custom_call.1
$region0: #{tpu_custom_call.1}
  #allocation0 [shape = 'u32[]', space=smem, size = 0x4, offset = 0x4, fixed_abs, tag = 'smem constant byte address 0x4 - core index']
  #allocation1 [shape = 'u32[144,128]{1,0:T(1,128)}', space=vmem, size = 0x12000, scoped, tag = 'internal scratch']
  %s0 = inlined_call_operand.hbm [shape: f32[2,8,32], index: 0, kind: input, shape index: {}]
  %s1 = inlined_call_operand.hbm [shape: f32[32,96], index: 1, kind: input, shape index: {}]
  %s2 = inlined_call_operand.hbm [shape: f32[32,32], index: 2, kind: input, shape index: {}]
  %s3 = inlined_call_operand.vmem [shape: f32[1,32], index: 3, kind: input, shape index: {}]
  %s4 = inlined_call_operand.vmem [shape: f32[1,32], index: 4, kind: input, shape index: {}]
  %s5 = inlined_call_operand.hbm [shape: f32[32,32], index: 5, kind: input, shape index: {}]
  %s6 = inlined_call_operand.vmem [shape: f32[1,32], index: 6, kind: input, shape index: {}]
  %s7 = inlined_call_operand.hbm [shape: f32[2,8,32], index: 7, kind: output, shape index: {}]
  %s8 = sld [smem:[#allocation0]]
  $region77: #{tpu_custom_call.1} parent=0
    _
  %s10 = ssub.s32 1, %s8
  %s11 = scalar_select 0, %s10, %s8
  $region1: #{tpu_custom_call.1} parent=0
    #allocation2 [shape = 'u8[8192]{0}', space=vmem, size = 0x2000, scoped, tag = 'input window, operand 0']
    #allocation3 [shape = 's32[2]{0}', space=sflag, size = 0x8, scoped, tag = 'scoped memory for tpu_custom_call.1']
    #allocation4 [shape = 's32[2]{0}', space=sflag, size = 0x8, scoped, tag = 'scoped memory for tpu_custom_call.1']
    #allocation5 [shape = 'u8[16384]{0}', space=vmem, size = 0x4000, scoped, tag = 'input window, operand 1, single buffered']
    #allocation6 [shape = 's32[1]{0}', space=sflag, size = 0x4, scoped, tag = 'scoped memory for tpu_custom_call.1']
    #allocation7 [shape = 'u8[16384]{0}', space=vmem, size = 0x4000, scoped, tag = 'input window, operand 2, single buffered']
    #allocation8 [shape = 'u8[16384]{0}', space=vmem, size = 0x4000, scoped, tag = 'input window, operand 5, single buffered']
    #allocation9 [shape = 's32[1]{0}', space=sflag, size = 0x4, scoped, tag = 'scoped memory for tpu_custom_call.1']
    #allocation10 [shape = 'u8[8192]{0}', space=vmem, size = 0x2000, scoped, tag = 'output window, operand 0']
    %12 = vsyncpa [#allocation3], 0
    %s13 = scalar_lea.sflag [#allocation3], 1
    %14 = vsyncpa %s13, 0
    %15 = vsyncpa [#allocation6], 0
    %16 = vsyncpa [#allocation9], 0
    %17 = vsyncpa [#allocation4], 0
    %s18 = scalar_lea.sflag [#allocation4], 1
    %19 = vsyncpa %s18, 0
    loop: start=0, step=1, limit=4
    $region2: #{tpu_custom_call.1} parent=1 // loop_pre_header
      _
    $region3: #{tpu_custom_call.1} parent=1 // loop_header
      %s21 = sphi 0, %s25
      %p22 = scmp.ge.s32.totalorder %s21, 4
      %s31 = sphi 0, %s33
      %s34 = sphi 0, %s31
      %s35 = sphi 0, %s34
      %s51 = sphi 0, %s35
      %s55 = sphi 0, %s55
      %s57 = sphi 0, %s55
      %s58 = sphi 0, %s57
      %s72 = sphi 0, %s58
      %s76 = sphi 0, %s76
      %s78 = sphi 0, %s76
      %s79 = sphi 0, %s78
      %s93 = sphi 0, %s79
      %s97 = sphi 0, %s97
      %s99 = sphi 0, %s97
      %s100 = sphi 0, %s99
      %s114 = sphi 0, %s100
      %s118 = sphi 0, %s118
      %s120 = sphi 0, %s118
      %s121 = sphi 0, %s120
      %s135 = sphi 0, %s121
      %s139 = sphi 0, %s139
      %s141 = sphi 0, %s139
      %s142 = sphi 0, %s141
      %s156 = sphi 0, %s142
      %s160 = sphi 0, %s160
      %s162 = sphi 0, %s160
      %s163 = sphi 0, %s162
      %s177 = sphi 0, %s163
      %s183 = sphi 0, %s185
      %s186 = sphi 0, %s183
      %s187 = sphi 0, %s186
      %s203 = sphi 0, %s187
    $region4: #{tpu_custom_call.1} parent=1 // loop_header_branch
      %24 = sbr.rel (%p22) target = $region8
    $region5: #{tpu_custom_call.1} parent=1 // loop_body
      %s26 = ssub.s32 %s21, 1
      %s27 = ssub.s32 %s21, 2
      %s28 = sadd.s32 %s21, 1
      %s29 = ssub.s32 %s21, %s28
      %p30 = scmp.eq.s32.totalorder %s29, 0
      %s32 = sadd.s32 %s31, 1
      %s33 = scalar_select %p30, %s31, %s32
      %p36 = pneg %p30
      %p37 = scmp.eq.s32.totalorder %s21, 1
      %p38 = por %p36, %p37
      %p39 = scmp.ne.s32.totalorder %s31, %s34
      %p40 = scmp.eq.s32.totalorder %s21, 0
      %p41 = por %p39, %p40
      %p42 = scmp.ne.s32.totalorder %s31, %s34
      %p43 = scmp.eq.s32.totalorder %s26, 1
      %p44 = por %p42, %p43
      %p45 = scmp.ne.s32.totalorder %s34, %s35
      %p46 = scmp.eq.s32.totalorder %s26, 0
      %p47 = por %p45, %p46
      %p48 = scmp.ne.s32.totalorder %s34, %s35
      %p49 = scmp.eq.s32.totalorder %s27, 1
      %p50 = por %p48, %p49
      %p52 = scmp.ne.s32.totalorder %s35, %s51
      %p53 = scmp.eq.s32.totalorder %s27, 0
      %p54 = por %p52, %p53
      %s56 = sadd.s32 %s55, 1
      %p59 = scmp.eq.s32.totalorder %s21, 1
      %p60 = scmp.ne.s32.totalorder %s55, %s57
      %p61 = scmp.eq.s32.totalorder %s21, 0
      %p62 = por %p60, %p61
      %p63 = scmp.ne.s32.totalorder %s55, %s57
      %p64 = scmp.eq.s32.totalorder %s26, 1
      %p65 = por %p63, %p64
      %p66 = scmp.ne.s32.totalorder %s57, %s58
      %p67 = scmp.eq.s32.totalorder %s26, 0
      %p68 = por %p66, %p67
      %p69 = scmp.ne.s32.totalorder %s57, %s58
      %p70 = scmp.eq.s32.totalorder %s27, 1
      %p71 = por %p69, %p70
      %p73 = scmp.ne.s32.totalorder %s58, %s72
      %p74 = scmp.eq.s32.totalorder %s27, 0
      %p75 = por %p73, %p74
      %s77 = sadd.s32 %s76, 1
      %p80 = scmp.eq.s32.totalorder %s21, 1
      %p81 = scmp.ne.s32.totalorder %s76, %s78
      %p82 = scmp.eq.s32.totalorder %s21, 0
      %p83 = por %p81, %p82
      %p84 = scmp.ne.s32.totalorder %s76, %s78
      %p85 = scmp.eq.s32.totalorder %s26, 1
      %p86 = por %p84, %p85
      %p87 = scmp.ne.s32.totalorder %s78, %s79
      %p88 = scmp.eq.s32.totalorder %s26, 0
      %p89 = por %p87, %p88
      %p90 = scmp.ne.s32.totalorder %s78, %s79
      %p91 = scmp.eq.s32.totalorder %s27, 1
      %p92 = por %p90, %p91
      %p94 = scmp.ne.s32.totalorder %s79, %s93
      %p95 = scmp.eq.s32.totalorder %s27, 0
      %p96 = por %p94, %p95
      %s98 = sadd.s32 %s97, 1
      %p101 = scmp.eq.s32.totalorder %s21, 1
      %p102 = scmp.ne.s32.totalorder %s97, %s99
      %p103 = scmp.eq.s32.totalorder %s21, 0
      %p104 = por %p102, %p103
      %p105 = scmp.ne.s32.totalorder %s97, %s99
      %p106 = scmp.eq.s32.totalorder %s26, 1
      %p107 = por %p105, %p106
      %p108 = scmp.ne.s32.totalorder %s99, %s100
      %p109 = scmp.eq.s32.totalorder %s26, 0
      %p110 = por %p108, %p109
      %p111 = scmp.ne.s32.totalorder %s99, %s100
      %p112 = scmp.eq.s32.totalorder %s27, 1
      %p113 = por %p111, %p112
      %p115 = scmp.ne.s32.totalorder %s100, %s114
      %p116 = scmp.eq.s32.totalorder %s27, 0
      %p117 = por %p115, %p116
      %s119 = sadd.s32 %s118, 1
      %p122 = scmp.eq.s32.totalorder %s21, 1
      %p123 = scmp.ne.s32.totalorder %s118, %s120
      %p124 = scmp.eq.s32.totalorder %s21, 0
      %p125 = por %p123, %p124
      %p126 = scmp.ne.s32.totalorder %s118, %s120
      %p127 = scmp.eq.s32.totalorder %s26, 1
      %p128 = por %p126, %p127
      %p129 = scmp.ne.s32.totalorder %s120, %s121
      %p130 = scmp.eq.s32.totalorder %s26, 0
      %p131 = por %p129, %p130
      %p132 = scmp.ne.s32.totalorder %s120, %s121
      %p133 = scmp.eq.s32.totalorder %s27, 1
      %p134 = por %p132, %p133
      %p136 = scmp.ne.s32.totalorder %s121, %s135
      %p137 = scmp.eq.s32.totalorder %s27, 0
      %p138 = por %p136, %p137
      %s140 = sadd.s32 %s139, 1
      %p143 = scmp.eq.s32.totalorder %s21, 1
      %p144 = scmp.ne.s32.totalorder %s139, %s141
      %p145 = scmp.eq.s32.totalorder %s21, 0
      %p146 = por %p144, %p145
      %p147 = scmp.ne.s32.totalorder %s139, %s141
      %p148 = scmp.eq.s32.totalorder %s26, 1
      %p149 = por %p147, %p148
      %p150 = scmp.ne.s32.totalorder %s141, %s142
      %p151 = scmp.eq.s32.totalorder %s26, 0
      %p152 = por %p150, %p151
      %p153 = scmp.ne.s32.totalorder %s141, %s142
      %p154 = scmp.eq.s32.totalorder %s27, 1
      %p155 = por %p153, %p154
      %p157 = scmp.ne.s32.totalorder %s142, %s156
      %p158 = scmp.eq.s32.totalorder %s27, 0
      %p159 = por %p157, %p158
      %s161 = sadd.s32 %s160, 1
      %p164 = scmp.eq.s32.totalorder %s21, 1
      %p165 = scmp.ne.s32.totalorder %s160, %s162
      %p166 = scmp.eq.s32.totalorder %s21, 0
      %p167 = por %p165, %p166
      %p168 = scmp.ne.s32.totalorder %s160, %s162
      %p169 = scmp.eq.s32.totalorder %s26, 1
      %p170 = por %p168, %p169
      %p171 = scmp.ne.s32.totalorder %s162, %s163
      %p172 = scmp.eq.s32.totalorder %s26, 0
      %p173 = por %p171, %p172
      %p174 = scmp.ne.s32.totalorder %s162, %s163
      %p175 = scmp.eq.s32.totalorder %s27, 1
      %p176 = por %p174, %p175
      %p178 = scmp.ne.s32.totalorder %s163, %s177
      %p179 = scmp.eq.s32.totalorder %s27, 0
      %p180 = por %p178, %p179
      %s181 = ssub.s32 %s21, %s28
      %p182 = scmp.eq.s32.totalorder %s181, 0
      %s184 = sadd.s32 %s183, 1
      %s185 = scalar_select %p182, %s183, %s184
      %p188 = pneg %p182
      %p189 = scmp.eq.s32.totalorder %s21, 1
      %p190 = por %p188, %p189
      %p191 = scmp.ne.s32.totalorder %s183, %s186
      %p192 = scmp.eq.s32.totalorder %s21, 0
      %p193 = por %p191, %p192
      %p194 = scmp.ne.s32.totalorder %s183, %s186
      %p195 = scmp.eq.s32.totalorder %s26, 1
      %p196 = por %p194, %p195
      %p197 = scmp.ne.s32.totalorder %s186, %s187
      %p198 = scmp.eq.s32.totalorder %s26, 0
      %p199 = por %p197, %p198
      %p200 = scmp.ne.s32.totalorder %s186, %s187
      %p201 = scmp.eq.s32.totalorder %s27, 1
      %p202 = por %p200, %p201
      %p204 = scmp.ne.s32.totalorder %s187, %s203
      %p205 = scmp.eq.s32.totalorder %s27, 0
      %p206 = por %p204, %p205
      %p207 = scmp.le.s32.totalorder 1, %s21
      %p208 = scmp.lt.s32.totalorder %s21, 3
      %p209 = pnand %p207, %p208
      %p210 = pneg %p209
      // Predicated region
      $region9: #{tpu_custom_call.1} parent=5 // pred_check
        _
      $region10: #{tpu_custom_call.1} parent=5 // pred_check_branch
        %212 = sbr.rel (%p209) target = $region12
      $region11: #{tpu_custom_call.1} parent=5 // pred_region
        %s213 = ssub.s32 %s21, 1
        // Predicated region
        $region13: #{tpu_custom_call.1} parent=11 // pred_check
          %p214 = pneg %p68
        $region14: #{tpu_custom_call.1} parent=11 // pred_check_branch
          %216 = sbr.rel (%p214) target = $region16
        $region15: #{tpu_custom_call.1} parent=11 // pred_region
          %s218 = ssub.s32 512, 512
          %219 = vsyncadd [#allocation6], %s218
          %s220 = sshll.u32 [#allocation5], 4
          %s221 = int_to_ptr.vmem [resolvable:$true] %s220
          %226 = dma.hbm_to_vmem [thread:$0]  %s1, 512, %s221, [#allocation6], 128, 128, 8
        $region16: #{tpu_custom_call.1} parent=11 // pred_fallthru
          _
        // Predicated region
        $region17: #{tpu_custom_call.1} parent=11 // pred_check
          %p227 = pneg %p89
        $region18: #{tpu_custom_call.1} parent=11 // pred_check_branch
          %229 = sbr.rel (%p227) target = $region20
        $region19: #{tpu_custom_call.1} parent=11 // pred_region
          %s231 = ssub.s32 512, 512
          %232 = vsyncadd [#allocation6], %s231
          %s233 = sshll.u32 [#allocation7], 4
          %s234 = int_to_ptr.vmem [resolvable:$true] %s233
          %239 = dma.hbm_to_vmem [thread:$0]  %s2, 512, %s234, [#allocation6], 128, 128, 8
        $region20: #{tpu_custom_call.1} parent=11 // pred_fallthru
          _
        // Predicated region
        $region21: #{tpu_custom_call.1} parent=11 // pred_check
          %p240 = pneg %p110
        $region22: #{tpu_custom_call.1} parent=11 // pred_check_branch
          %242 = sbr.rel (%p240) target = $region24
        $region23: #{tpu_custom_call.1} parent=11 // pred_region
          _
        $region24: #{tpu_custom_call.1} parent=11 // pred_fallthru
          _
        // Predicated region
        $region25: #{tpu_custom_call.1} parent=11 // pred_check
          %p243 = pneg %p131
        $region26: #{tpu_custom_call.1} parent=11 // pred_check_branch
          %245 = sbr.rel (%p243) target = $region28
        $region27: #{tpu_custom_call.1} parent=11 // pred_region
          _
        $region28: #{tpu_custom_call.1} parent=11 // pred_fallthru
          _
        // Predicated region
        $region29: #{tpu_custom_call.1} parent=11 // pred_check
          %p246 = pneg %p152
        $region30: #{tpu_custom_call.1} parent=11 // pred_check_branch
          %248 = sbr.rel (%p246) target = $region32
        $region31: #{tpu_custom_call.1} parent=11 // pred_region
          %s250 = ssub.s32 512, 512
          %251 = vsyncadd [#allocation9], %s250
          %s252 = sshll.u32 [#allocation8], 4
          %s253 = int_to_ptr.vmem [resolvable:$true] %s252
          %258 = dma.hbm_to_vmem [thread:$0]  %s5, 512, %s253, [#allocation9], 128, 128, 8
        $region32: #{tpu_custom_call.1} parent=11 // pred_fallthru
          _
        // Predicated region
        $region33: #{tpu_custom_call.1} parent=11 // pred_check
          %p259 = pneg %p173
        $region34: #{tpu_custom_call.1} parent=11 // pred_check_branch
          %261 = sbr.rel (%p259) target = $region36
        $region35: #{tpu_custom_call.1} parent=11 // pred_region
          _
        $region36: #{tpu_custom_call.1} parent=11 // pred_fallthru
          _
      $region12: #{tpu_custom_call.1} parent=5 // pred_fallthru
        _
      %p262 = scmp.lt.s32.totalorder %s21, 2
      // Predicated region
      $region37: #{tpu_custom_call.1} parent=5 // pred_check
        %p263 = pneg %p262
      $region38: #{tpu_custom_call.1} parent=5 // pred_check_branch
        %265 = sbr.rel (%p263) target = $region40
      $region39: #{tpu_custom_call.1} parent=5 // pred_region
        // Predicated region
        $region41: #{tpu_custom_call.1} parent=39 // pred_check
          %p266 = pneg %p41
        $region42: #{tpu_custom_call.1} parent=39 // pred_check_branch
          %268 = sbr.rel (%p266) target = $region44
        $region43: #{tpu_custom_call.1} parent=39 // pred_region
          %s269 = sand.u32 %s31, 1
          %s270 = scalar_lea.sflag [#allocation3], %s269
          %s271 = sand.u32 %s31, 1
          %s272 = smul.addr %s271, 8
          %s273 = scalar_lea.vmem [#allocation2], %s272
          %s275 = ssub.s32 128, 128
          %276 = vsyncadd %s270, %s275
          %s277 = smul.addr %s21, 128
          %s278 = scalar_lea.hbm %s0, %s277
          %s280 = sshll.u32 %s273, 4
          %s281 = int_to_ptr.vmem [resolvable:$true] %s280
          %283 = dma.hbm_to_vmem [thread:$0]  %s278, 128, %s281, %s270
        $region44: #{tpu_custom_call.1} parent=39 // pred_fallthru
          _
      $region40: #{tpu_custom_call.1} parent=5 // pred_fallthru
        _
      %p284 = scmp.le.s32.totalorder 1, %s21
      %p285 = scmp.lt.s32.totalorder %s21, 3
      %p286 = pnand %p284, %p285
      %p287 = pneg %p286
      // Predicated region
      $region45: #{tpu_custom_call.1} parent=5 // pred_check
        _
      $region46: #{tpu_custom_call.1} parent=5 // pred_check_branch
        %289 = sbr.rel (%p286) target = $region48
      $region47: #{tpu_custom_call.1} parent=5 // pred_region
        %s290 = ssub.s32 %s21, 1
        %s291 = sand.u32 %s34, 1
        %s292 = scalar_lea.sflag [#allocation3], %s291
        %s293 = sand.u32 %s34, 1
        %s294 = smul.addr %s293, 8
        %s295 = scalar_lea.vmem [#allocation2], %s294
        // Predicated region
        $region49: #{tpu_custom_call.1} parent=47 // pred_check
          %p296 = pneg %p47
        $region50: #{tpu_custom_call.1} parent=47 // pred_check_branch
          %298 = sbr.rel (%p296) target = $region52
        $region51: #{tpu_custom_call.1} parent=47 // pred_region
          %299 = dma.done %s292, 128
        $region52: #{tpu_custom_call.1} parent=47 // pred_fallthru
          _
        // Predicated region
        $region53: #{tpu_custom_call.1} parent=47 // pred_check
          %p300 = pneg %p68
        $region54: #{tpu_custom_call.1} parent=47 // pred_check_branch
          %302 = sbr.rel (%p300) target = $region56
        $region55: #{tpu_custom_call.1} parent=47 // pred_region
          %303 = dma.done [#allocation6], 512
        $region56: #{tpu_custom_call.1} parent=47 // pred_fallthru
          _
        // Predicated region
        $region57: #{tpu_custom_call.1} parent=47 // pred_check
          %p304 = pneg %p89
        $region58: #{tpu_custom_call.1} parent=47 // pred_check_branch
          %306 = sbr.rel (%p304) target = $region60
        $region59: #{tpu_custom_call.1} parent=47 // pred_region
          %307 = dma.done [#allocation6], 512
        $region60: #{tpu_custom_call.1} parent=47 // pred_fallthru
          _
        // Predicated region
        $region61: #{tpu_custom_call.1} parent=47 // pred_check
          %p308 = pneg %p152
        $region62: #{tpu_custom_call.1} parent=47 // pred_check_branch
          %310 = sbr.rel (%p308) target = $region64
        $region63: #{tpu_custom_call.1} parent=47 // pred_region
          %311 = dma.done [#allocation9], 512
        $region64: #{tpu_custom_call.1} parent=47 // pred_fallthru
          _
        %s312 = sand.u32 %s34, 1
        %s313 = scalar_lea.sflag [#allocation3], %s312
        %s314 = sand.u32 %s34, 1
        %s315 = smul.addr %s314, 8
        %s316 = scalar_lea.vmem [#allocation2], %s315
        %p317 = pneg %p47
        %p318 = pneg %p44
        %p319 = pneg %p68
        %p320 = pneg %p65
        %p321 = pneg %p89
        %p322 = pneg %p86
        %p323 = pneg %p110
        %p324 = pneg %p107
        %p325 = pneg %p131
        %p326 = pneg %p128
        %p327 = pneg %p152
        %p328 = pneg %p149
        %p329 = pneg %p173
        %p330 = pneg %p170
        %p331 = pneg %p199
        %p332 = pneg %p196
        %s333 = sand.u32 %s186, 1
        %s334 = scalar_lea.sflag [#allocation4], %s333
        %s335 = sand.u32 %s186, 1
        %s336 = smul.addr %s335, 8
        %s337 = scalar_lea.vmem [#allocation10], %s336
        %v338 = vld [vmem:[%s295] sm:$0xff]
        %v339 = vld [vmem:[#allocation5] sm:$0xff]
        %v340 = vld [vmem:[#allocation5 + $0x8] sm:$0xff]
        %v341 = vld [vmem:[#allocation5 + $0x10] sm:$0xff]
        %v342 = vld [vmem:[#allocation5 + $0x18] sm:$0xff]
        %vm343 = vcmask 261120
        %v345 = vsel %vm343, %v338, 0
        %347 = vmatprep.subr.mxu0 0.0
        %348 = vmatpush1.msra.mxu0 %v339
        %349 = vmatprep.subr.mxu0 0.0
        %350 = vmatpush1.msra.mxu0 %v340
        %351 = vmatprep.subr.mxu0 0.0
        %352 = vmatpush1.msra.mxu0 %v341
        %353 = vmatprep.subr.mxu0 0.0
        %354 = vmatpush1.msra.mxu0 %v342
        %355 = vmatprep.subr.mxu0 0.0
        %356 = vmatpush1.msra.mxu0 0.0
        %357 = vmatprep.subr.mxu0 0.0
        %358 = vmatpush1.msra.mxu0 0.0
        %359 = vmatprep.subr.mxu0 0.0
        %360 = vmatpush1.msra.mxu0 0.0
        %361 = vmatprep.subr.mxu0 0.0
        %362 = vmatpush1.msra.mxu0 0.0
        %363 = vmatprep.subr.mxu0 0.0
        %364 = vmatpush1.msra.mxu0 0.0
        %365 = vmatprep.subr.mxu0 0.0
        %366 = vmatpush1.msra.mxu0 0.0
        %367 = vmatprep.subr.mxu0 0.0
        %368 = vmatpush1.msra.mxu0 0.0
        %369 = vmatprep.subr.mxu0 0.0
        %370 = vmatpush1.msra.mxu0 0.0
        %371 = vmatprep.subr.mxu0 0.0
        %372 = vmatpush1.msra.mxu0 0.0
        %373 = vmatprep.subr.mxu0 0.0
        %374 = vmatpush1.msra.mxu0 0.0
        %375 = vmatprep.subr.mxu0 0.0
        %376 = vmatpush1.msra.mxu0 0.0
        %377 = vmatprep.subr.mxu0 0.0
        %378 = vmatpush1.msra.mxu0 0.0
        %379 = vmatprep.subr.mxu0 0.0
        %380 = vmatpush1.msra.mxu0 0.0
        %381 = vmatprep.subr.mxu0 0.0
        %382 = vmatpush1.msra.mxu0 0.0
        %383 = vmatprep.subr.mxu0 0.0
        %384 = vmatpush1.msra.mxu0 0.0
        %385 = vmatprep.subr.mxu0 0.0
        %386 = vmatpush1.msra.mxu0 0.0
        %387 = vmatprep.subr.mxu0 0.0
        %388 = vmatpush1.msra.mxu0 0.0
        %389 = vmatprep.subr.mxu0 0.0
        %390 = vmatpush1.msra.mxu0 0.0
        %391 = vmatprep.subr.mxu0 0.0
        %392 = vmatpush1.msra.mxu0 0.0
        %393 = vmatprep.subr.mxu0 0.0
        %394 = vmatpush1.msra.mxu0 0.0
        %395 = vmatprep.subr.mxu0 0.0
        %396 = vmatpush1.msra.mxu0 0.0
        %397 = vmatprep.subr.mxu0 0.0
        %398 = vmatpush1.msra.mxu0 0.0
        %399 = vmatprep.subr.mxu0 0.0
        %400 = vmatpush1.msra.mxu0 0.0
        %401 = vmatprep.subr.mxu0 0.0
        %402 = vmatpush1.msra.mxu0 0.0
        %403 = vmatprep.subr.mxu0 0.0
        %404 = vmatpush1.msra.mxu0 0.0
        %405 = vmatprep.subr.mxu0 0.0
        %406 = vmatpush1.msra.mxu0 0.0
        %407 = vmatprep.subr.mxu0 0.0
        %408 = vmatpush1.msra.mxu0 0.0
        %409 = vmatprep.subr.mxu0 0.0
        %410 = vmatpush1.msra.mxu0 0.0
        %411 = vmatprep.mubr.f32.mxu0 0.0
        %412 = vmatmul.mubr.f32.gmra.mrb[0].mxu0 %v345
        %v413 = vpop.f32.mrb[0].mxu0
        %v414 = vadd.f32 0.0, %v413
        %v415 = vpop.f32.mrb[0].mxu0
        %416 = vdwg.mxu0
        %418 = vrot.lane.b32.xlu0 %v414, 96
        %v419 = vpop.permute.xlu0 %418
        %vm420 = vcmask 64512
        %v421 = vsel %vm420, %v414, 0
        %v423 = vsel %vm420, %v419, 0
        %425 = vmatprep.subr.mxu0 0.0
        %426 = vmatpush1.xpose.msra.mxu0 %v423
        %427 = vmatprep.subr.mxu0 0.0
        %428 = vmatpush1.xpose.msra.mxu0 0.0
        %429 = vmatprep.subr.mxu0 0.0
        %430 = vmatpush1.xpose.msra.mxu0 0.0
        %431 = vmatprep.subr.mxu0 0.0
        %432 = vmatpush1.xpose.msra.mxu0 0.0
        %433 = vmatprep.subr.mxu0 0.0
        %434 = vmatpush1.xpose.msra.mxu0 0.0
        %435 = vmatprep.subr.mxu0 0.0
        %436 = vmatpush1.xpose.msra.mxu0 0.0
        %437 = vmatprep.subr.mxu0 0.0
        %438 = vmatpush1.xpose.msra.mxu0 0.0
        %439 = vmatprep.subr.mxu0 0.0
        %440 = vmatpush1.xpose.msra.mxu0 0.0
        %441 = vmatprep.subr.mxu0 0.0
        %442 = vmatpush1.xpose.msra.mxu0 0.0
        %443 = vmatprep.subr.mxu0 0.0
        %444 = vmatpush1.xpose.msra.mxu0 0.0
        %445 = vmatprep.subr.mxu0 0.0
        %446 = vmatpush1.xpose.msra.mxu0 0.0
        %447 = vmatprep.subr.mxu0 0.0
        %448 = vmatpush1.xpose.msra.mxu0 0.0
        %449 = vmatprep.subr.mxu0 0.0
        %450 = vmatpush1.xpose.msra.mxu0 0.0
        %451 = vmatprep.subr.mxu0 0.0
        %452 = vmatpush1.xpose.msra.mxu0 0.0
        %453 = vmatprep.subr.mxu0 0.0
        %454 = vmatpush1.xpose.msra.mxu0 0.0
        %455 = vmatprep.subr.mxu0 0.0
        %456 = vmatpush1.xpose.msra.mxu0 0.0
        %457 = vmatprep.subr.mxu0 0.0
        %458 = vmatpush1.xpose.msra.mxu0 0.0
        %459 = vmatprep.subr.mxu0 0.0
        %460 = vmatpush1.xpose.msra.mxu0 0.0
        %461 = vmatprep.subr.mxu0 0.0
        %462 = vmatpush1.xpose.msra.mxu0 0.0
        %463 = vmatprep.subr.mxu0 0.0
        %464 = vmatpush1.xpose.msra.mxu0 0.0
        %465 = vmatprep.subr.mxu0 0.0
        %466 = vmatpush1.xpose.msra.mxu0 0.0
        %467 = vmatprep.subr.mxu0 0.0
        %468 = vmatpush1.xpose.msra.mxu0 0.0
        %469 = vmatprep.subr.mxu0 0.0
        %470 = vmatpush1.xpose.msra.mxu0 0.0
        %471 = vmatprep.subr.mxu0 0.0
        %472 = vmatpush1.xpose.msra.mxu0 0.0
        %473 = vmatprep.subr.mxu0 0.0
        %474 = vmatpush1.xpose.msra.mxu0 0.0
        %475 = vmatprep.subr.mxu0 0.0
        %476 = vmatpush1.xpose.msra.mxu0 0.0
        %477 = vmatprep.subr.mxu0 0.0
        %478 = vmatpush1.xpose.msra.mxu0 0.0
        %479 = vmatprep.subr.mxu0 0.0
        %480 = vmatpush1.xpose.msra.mxu0 0.0
        %481 = vmatprep.subr.mxu0 0.0
        %482 = vmatpush1.xpose.msra.mxu0 0.0
        %483 = vmatprep.subr.mxu0 0.0
        %484 = vmatpush1.xpose.msra.mxu0 0.0
        %485 = vmatprep.subr.mxu0 0.0
        %486 = vmatpush1.xpose.msra.mxu0 0.0
        %487 = vmatprep.subr.mxu0 0.0
        %488 = vmatpush1.xpose.msra.mxu0 0.0
        %489 = vmatprep.mubr.f32.mxu0 0.0
        %490 = vmatmul.mubr.f32.gmra.mrb[0].mxu0 %v421
        %v491 = vpop.f32.mrb[0].mxu0
        %v492 = vadd.f32 0.0, %v491
        %v493 = vpop.f32.mrb[0].mxu0
        %494 = vdwg.mxu0
        %495 = vrot.lane.b32.xlu0 %v414, 64
        %v496 = vpop.permute.xlu0 %495
        %v499 = vsel %vm420, %v492, 0
        %501 = vmatprep.subr.mxu0 0.0
        %502 = vmatpush1.msra.mxu0 %v496
        %503 = vmatprep.subr.mxu0 0.0
        %504 = vmatpush1.msra.mxu0 0.0
        %505 = vmatprep.subr.mxu0 0.0
        %506 = vmatpush1.msra.mxu0 0.0
        %507 = vmatprep.subr.mxu0 0.0
        %508 = vmatpush1.msra.mxu0 0.0
        %509 = vmatprep.subr.mxu0 0.0
        %510 = vmatpush1.msra.mxu0 0.0
        %511 = vmatprep.subr.mxu0 0.0
        %512 = vmatpush1.msra.mxu0 0.0
        %513 = vmatprep.subr.mxu0 0.0
        %514 = vmatpush1.msra.mxu0 0.0
        %515 = vmatprep.subr.mxu0 0.0
        %516 = vmatpush1.msra.mxu0 0.0
        %517 = vmatprep.subr.mxu0 0.0
        %518 = vmatpush1.msra.mxu0 0.0
        %519 = vmatprep.subr.mxu0 0.0
        %520 = vmatpush1.msra.mxu0 0.0
        %521 = vmatprep.subr.mxu0 0.0
        %522 = vmatpush1.msra.mxu0 0.0
        %523 = vmatprep.subr.mxu0 0.0
        %524 = vmatpush1.msra.mxu0 0.0
        %525 = vmatprep.subr.mxu0 0.0
        %526 = vmatpush1.msra.mxu0 0.0
        %527 = vmatprep.subr.mxu0 0.0
        %528 = vmatpush1.msra.mxu0 0.0
        %529 = vmatprep.subr.mxu0 0.0
        %530 = vmatpush1.msra.mxu0 0.0
        %531 = vmatprep.subr.mxu0 0.0
        %532 = vmatpush1.msra.mxu0 0.0
        %533 = vmatprep.subr.mxu0 0.0
        %534 = vmatpush1.msra.mxu0 0.0
        %535 = vmatprep.subr.mxu0 0.0
        %536 = vmatpush1.msra.mxu0 0.0
        %537 = vmatprep.subr.mxu0 0.0
        %538 = vmatpush1.msra.mxu0 0.0
        %539 = vmatprep.subr.mxu0 0.0
        %540 = vmatpush1.msra.mxu0 0.0
        %541 = vmatprep.subr.mxu0 0.0
        %542 = vmatpush1.msra.mxu0 0.0
        %543 = vmatprep.subr.mxu0 0.0
        %544 = vmatpush1.msra.mxu0 0.0
        %545 = vmatprep.subr.mxu0 0.0
        %546 = vmatpush1.msra.mxu0 0.0
        %547 = vmatprep.subr.mxu0 0.0
        %548 = vmatpush1.msra.mxu0 0.0
        %549 = vmatprep.subr.mxu0 0.0
        %550 = vmatpush1.msra.mxu0 0.0
        %551 = vmatprep.subr.mxu0 0.0
        %552 = vmatpush1.msra.mxu0 0.0
        %553 = vmatprep.subr.mxu0 0.0
        %554 = vmatpush1.msra.mxu0 0.0
        %555 = vmatprep.subr.mxu0 0.0
        %556 = vmatpush1.msra.mxu0 0.0
        %557 = vmatprep.subr.mxu0 0.0
        %558 = vmatpush1.msra.mxu0 0.0
        %559 = vmatprep.subr.mxu0 0.0
        %560 = vmatpush1.msra.mxu0 0.0
        %561 = vmatprep.subr.mxu0 0.0
        %562 = vmatpush1.msra.mxu0 0.0
        %563 = vmatprep.subr.mxu0 0.0
        %564 = vmatpush1.msra.mxu0 0.0
        %565 = vmatprep.mubr.f32.mxu0 0.0
        %566 = vmatmul.mubr.f32.gmra.mrb[0].mxu0 %v499
        %v567 = vpop.f32.mrb[0].mxu0
        %v568 = vadd.f32 0.0, %v567
        %v569 = vpop.f32.mrb[0].mxu0
        %570 = vdwg.mxu0
        %v571 = vld [vmem:[#allocation7] sm:$0xff]
        %572 = vrot.lane.b32.xlu0 %v414, 120
        %v573 = vpop.permute.xlu0 %572
        %574 = vrot.lane.b32.xlu0 %v414, 88
        %v575 = vpop.permute.xlu0 %574
        %v576 = vsel %vm420, %v573, 0
        %v578 = vsel %vm420, %v575, 0
        %580 = vmatprep.subr.mxu0 0.0
        %581 = vmatpush1.xpose.msra.mxu0 %v578
        %582 = vmatprep.subr.mxu0 0.0
        %583 = vmatpush1.xpose.msra.mxu0 0.0
        %584 = vmatprep.subr.mxu0 0.0
        %585 = vmatpush1.xpose.msra.mxu0 0.0
        %586 = vmatprep.subr.mxu0 0.0
        %587 = vmatpush1.xpose.msra.mxu0 0.0
        %588 = vmatprep.subr.mxu0 0.0
        %589 = vmatpush1.xpose.msra.mxu0 0.0
        %590 = vmatprep.subr.mxu0 0.0
        %591 = vmatpush1.xpose.msra.mxu0 0.0
        %592 = vmatprep.subr.mxu0 0.0
        %593 = vmatpush1.xpose.msra.mxu0 0.0
        %594 = vmatprep.subr.mxu0 0.0
        %595 = vmatpush1.xpose.msra.mxu0 0.0
        %596 = vmatprep.subr.mxu0 0.0
        %597 = vmatpush1.xpose.msra.mxu0 0.0
        %598 = vmatprep.subr.mxu0 0.0
        %599 = vmatpush1.xpose.msra.mxu0 0.0
        %600 = vmatprep.subr.mxu0 0.0
        %601 = vmatpush1.xpose.msra.mxu0 0.0
        %602 = vmatprep.subr.mxu0 0.0
        %603 = vmatpush1.xpose.msra.mxu0 0.0
        %604 = vmatprep.subr.mxu0 0.0
        %605 = vmatpush1.xpose.msra.mxu0 0.0
        %606 = vmatprep.subr.mxu0 0.0
        %607 = vmatpush1.xpose.msra.mxu0 0.0
        %608 = vmatprep.subr.mxu0 0.0
        %609 = vmatpush1.xpose.msra.mxu0 0.0
        %610 = vmatprep.subr.mxu0 0.0
        %611 = vmatpush1.xpose.msra.mxu0 0.0
        %612 = vmatprep.subr.mxu0 0.0
        %613 = vmatpush1.xpose.msra.mxu0 0.0
        %614 = vmatprep.subr.mxu0 0.0
        %615 = vmatpush1.xpose.msra.mxu0 0.0
        %616 = vmatprep.subr.mxu0 0.0
        %617 = vmatpush1.xpose.msra.mxu0 0.0
        %618 = vmatprep.subr.mxu0 0.0
        %619 = vmatpush1.xpose.msra.mxu0 0.0
        %620 = vmatprep.subr.mxu0 0.0
        %621 = vmatpush1.xpose.msra.mxu0 0.0
        %622 = vmatprep.subr.mxu0 0.0
        %623 = vmatpush1.xpose.msra.mxu0 0.0
        %624 = vmatprep.subr.mxu0 0.0
        %625 = vmatpush1.xpose.msra.mxu0 0.0
        %626 = vmatprep.subr.mxu0 0.0
        %627 = vmatpush1.xpose.msra.mxu0 0.0
        %628 = vmatprep.subr.mxu0 0.0
        %629 = vmatpush1.xpose.msra.mxu0 0.0
        %630 = vmatprep.subr.mxu0 0.0
        %631 = vmatpush1.xpose.msra.mxu0 0.0
        %632 = vmatprep.subr.mxu0 0.0
        %633 = vmatpush1.xpose.msra.mxu0 0.0
        %634 = vmatprep.subr.mxu0 0.0
        %635 = vmatpush1.xpose.msra.mxu0 0.0
        %636 = vmatprep.subr.mxu0 0.0
        %637 = vmatpush1.xpose.msra.mxu0 0.0
        %638 = vmatprep.subr.mxu0 0.0
        %639 = vmatpush1.xpose.msra.mxu0 0.0
        %640 = vmatprep.subr.mxu0 0.0
        %641 = vmatpush1.xpose.msra.mxu0 0.0
        %642 = vmatprep.subr.mxu0 0.0
        %643 = vmatpush1.xpose.msra.mxu0 0.0
        %644 = vmatprep.mubr.f32.mxu0 0.0
        %645 = vmatmul.mubr.f32.gmra.mrb[0].mxu0 %v576
        %v646 = vpop.f32.mrb[0].mxu0
        %v647 = vadd.f32 0.0, %v646
        %v648 = vpop.f32.mrb[0].mxu0
        %649 = vdwg.mxu0
        %650 = vrot.lane.b32.xlu0 %v414, 56
        %v651 = vpop.permute.xlu0 %650
        %v654 = vsel %vm420, %v647, 0
        %656 = vmatprep.subr.mxu0 0.0
        %657 = vmatpush1.msra.mxu0 %v651
        %658 = vmatprep.subr.mxu0 0.0
        %659 = vmatpush1.msra.mxu0 0.0
        %660 = vmatprep.subr.mxu0 0.0
        %661 = vmatpush1.msra.mxu0 0.0
        %662 = vmatprep.subr.mxu0 0.0
        %663 = vmatpush1.msra.mxu0 0.0
        %664 = vmatprep.subr.mxu0 0.0
        %665 = vmatpush1.msra.mxu0 0.0
        %666 = vmatprep.subr.mxu0 0.0
        %667 = vmatpush1.msra.mxu0 0.0
        %668 = vmatprep.subr.mxu0 0.0
        %669 = vmatpush1.msra.mxu0 0.0
        %670 = vmatprep.subr.mxu0 0.0
        %671 = vmatpush1.msra.mxu0 0.0
        %672 = vmatprep.subr.mxu0 0.0
        %673 = vmatpush1.msra.mxu0 0.0
        %674 = vmatprep.subr.mxu0 0.0
        %675 = vmatpush1.msra.mxu0 0.0
        %676 = vmatprep.subr.mxu0 0.0
        %677 = vmatpush1.msra.mxu0 0.0
        %678 = vmatprep.subr.mxu0 0.0
        %679 = vmatpush1.msra.mxu0 0.0
        %680 = vmatprep.subr.mxu0 0.0
        %681 = vmatpush1.msra.mxu0 0.0
        %682 = vmatprep.subr.mxu0 0.0
        %683 = vmatpush1.msra.mxu0 0.0
        %684 = vmatprep.subr.mxu0 0.0
        %685 = vmatpush1.msra.mxu0 0.0
        %686 = vmatprep.subr.mxu0 0.0
        %687 = vmatpush1.msra.mxu0 0.0
        %688 = vmatprep.subr.mxu0 0.0
        %689 = vmatpush1.msra.mxu0 0.0
        %690 = vmatprep.subr.mxu0 0.0
        %691 = vmatpush1.msra.mxu0 0.0
        %692 = vmatprep.subr.mxu0 0.0
        %693 = vmatpush1.msra.mxu0 0.0
        %694 = vmatprep.subr.mxu0 0.0
        %695 = vmatpush1.msra.mxu0 0.0
        %696 = vmatprep.subr.mxu0 0.0
        %697 = vmatpush1.msra.mxu0 0.0
        %698 = vmatprep.subr.mxu0 0.0
        %699 = vmatpush1.msra.mxu0 0.0
        %700 = vmatprep.subr.mxu0 0.0
        %701 = vmatpush1.msra.mxu0 0.0
        %702 = vmatprep.subr.mxu0 0.0
        %703 = vmatpush1.msra.mxu0 0.0
        %704 = vmatprep.subr.mxu0 0.0
        %705 = vmatpush1.msra.mxu0 0.0
        %706 = vmatprep.subr.mxu0 0.0
        %707 = vmatpush1.msra.mxu0 0.0
        %708 = vmatprep.subr.mxu0 0.0
        %709 = vmatpush1.msra.mxu0 0.0
        %710 = vmatprep.subr.mxu0 0.0
        %711 = vmatpush1.msra.mxu0 0.0
        %712 = vmatprep.subr.mxu0 0.0
        %713 = vmatpush1.msra.mxu0 0.0
        %714 = vmatprep.subr.mxu0 0.0
        %715 = vmatpush1.msra.mxu0 0.0
        %716 = vmatprep.subr.mxu0 0.0
        %717 = vmatpush1.msra.mxu0 0.0
        %718 = vmatprep.subr.mxu0 0.0
        %719 = vmatpush1.msra.mxu0 0.0
        %720 = vmatprep.mubr.f32.mxu0 0.0
        %721 = vmatmul.mubr.f32.gmra.mrb[0].mxu0 %v654
        %v722 = vpop.f32.mrb[0].mxu0
        %v723 = vadd.f32 0.0, %v722
        %v724 = vpop.f32.mrb[0].mxu0
        %725 = vdwg.mxu0
        %v726 = vld [vmem:[#allocation7 + $0x8] sm:$0xff]
        %v728 = vsel %vm420, %v723, 0
        %730 = vmatprep.subr.mxu0 0.0
        %731 = vmatpush1.msra.mxu0 %v726
        %732 = vmatprep.subr.mxu0 0.0
        %733 = vmatpush1.msra.mxu0 0.0
        %734 = vmatprep.subr.mxu0 0.0
        %735 = vmatpush1.msra.mxu0 0.0
        %736 = vmatprep.subr.mxu0 0.0
        %737 = vmatpush1.msra.mxu0 0.0
        %738 = vmatprep.subr.mxu0 0.0
        %739 = vmatpush1.msra.mxu0 0.0
        %740 = vmatprep.subr.mxu0 0.0
        %741 = vmatpush1.msra.mxu0 0.0
        %742 = vmatprep.subr.mxu0 0.0
        %743 = vmatpush1.msra.mxu0 0.0
        %744 = vmatprep.subr.mxu0 0.0
        %745 = vmatpush1.msra.mxu0 0.0
        %746 = vmatprep.subr.mxu0 0.0
        %747 = vmatpush1.msra.mxu0 0.0
        %748 = vmatprep.subr.mxu0 0.0
        %749 = vmatpush1.msra.mxu0 0.0
        %750 = vmatprep.subr.mxu0 0.0
        %751 = vmatpush1.msra.mxu0 0.0
        %752 = vmatprep.subr.mxu0 0.0
        %753 = vmatpush1.msra.mxu0 0.0
        %754 = vmatprep.subr.mxu0 0.0
        %755 = vmatpush1.msra.mxu0 0.0
        %756 = vmatprep.subr.mxu0 0.0
        %757 = vmatpush1.msra.mxu0 0.0
        %758 = vmatprep.subr.mxu0 0.0
        %759 = vmatpush1.msra.mxu0 0.0
        %760 = vmatprep.subr.mxu0 0.0
        %761 = vmatpush1.msra.mxu0 0.0
        %762 = vmatprep.subr.mxu0 0.0
        %763 = vmatpush1.msra.mxu0 0.0
        %764 = vmatprep.subr.mxu0 0.0
        %765 = vmatpush1.msra.mxu0 0.0
        %766 = vmatprep.subr.mxu0 0.0
        %767 = vmatpush1.msra.mxu0 0.0
        %768 = vmatprep.subr.mxu0 0.0
        %769 = vmatpush1.msra.mxu0 0.0
        %770 = vmatprep.subr.mxu0 0.0
        %771 = vmatpush1.msra.mxu0 0.0
        %772 = vmatprep.subr.mxu0 0.0
        %773 = vmatpush1.msra.mxu0 0.0
        %774 = vmatprep.subr.mxu0 0.0
        %775 = vmatpush1.msra.mxu0 0.0
        %776 = vmatprep.subr.mxu0 0.0
        %777 = vmatpush1.msra.mxu0 0.0
        %778 = vmatprep.subr.mxu0 0.0
        %779 = vmatpush1.msra.mxu0 0.0
        %780 = vmatprep.subr.mxu0 0.0
        %781 = vmatpush1.msra.mxu0 0.0
        %782 = vmatprep.subr.mxu0 0.0
        %783 = vmatpush1.msra.mxu0 0.0
        %784 = vmatprep.subr.mxu0 0.0
        %785 = vmatpush1.msra.mxu0 0.0
        %786 = vmatprep.subr.mxu0 0.0
        %787 = vmatpush1.msra.mxu0 0.0
        %788 = vmatprep.subr.mxu0 0.0
        %789 = vmatpush1.msra.mxu0 0.0
        %790 = vmatprep.subr.mxu0 0.0
        %791 = vmatpush1.msra.mxu0 0.0
        %792 = vmatprep.subr.mxu0 0.0
        %793 = vmatpush1.msra.mxu0 0.0
        %794 = vmatprep.mubr.f32.mxu0 0.0
        %795 = vmatmul.mubr.f32.gmra.mrb[0].mxu0 %v728
        %v796 = vpop.f32.mrb[0].mxu0
        %v797 = vadd.f32 0.0, %v796
        %v798 = vpop.f32.mrb[0].mxu0
        %799 = vdwg.mxu0
        %v801 = vsel %vm420, %v568, 0
        %803 = vmatprep.subr.mxu0 0.0
        %804 = vmatpush1.msra.mxu0 %v571
        %805 = vmatprep.subr.mxu0 0.0
        %806 = vmatpush1.msra.mxu0 0.0
        %807 = vmatprep.subr.mxu0 0.0
        %808 = vmatpush1.msra.mxu0 0.0
        %809 = vmatprep.subr.mxu0 0.0
        %810 = vmatpush1.msra.mxu0 0.0
        %811 = vmatprep.subr.mxu0 0.0
        %812 = vmatpush1.msra.mxu0 0.0
        %813 = vmatprep.subr.mxu0 0.0
        %814 = vmatpush1.msra.mxu0 0.0
        %815 = vmatprep.subr.mxu0 0.0
        %816 = vmatpush1.msra.mxu0 0.0
        %817 = vmatprep.subr.mxu0 0.0
        %818 = vmatpush1.msra.mxu0 0.0
        %819 = vmatprep.subr.mxu0 0.0
        %820 = vmatpush1.msra.mxu0 0.0
        %821 = vmatprep.subr.mxu0 0.0
        %822 = vmatpush1.msra.mxu0 0.0
        %823 = vmatprep.subr.mxu0 0.0
        %824 = vmatpush1.msra.mxu0 0.0
        %825 = vmatprep.subr.mxu0 0.0
        %826 = vmatpush1.msra.mxu0 0.0
        %827 = vmatprep.subr.mxu0 0.0
        %828 = vmatpush1.msra.mxu0 0.0
        %829 = vmatprep.subr.mxu0 0.0
        %830 = vmatpush1.msra.mxu0 0.0
        %831 = vmatprep.subr.mxu0 0.0
        %832 = vmatpush1.msra.mxu0 0.0
        %833 = vmatprep.subr.mxu0 0.0
        %834 = vmatpush1.msra.mxu0 0.0
        %835 = vmatprep.subr.mxu0 0.0
        %836 = vmatpush1.msra.mxu0 0.0
        %837 = vmatprep.subr.mxu0 0.0
        %838 = vmatpush1.msra.mxu0 0.0
        %839 = vmatprep.subr.mxu0 0.0
        %840 = vmatpush1.msra.mxu0 0.0
        %841 = vmatprep.subr.mxu0 0.0
        %842 = vmatpush1.msra.mxu0 0.0
        %843 = vmatprep.subr.mxu0 0.0
        %844 = vmatpush1.msra.mxu0 0.0
        %845 = vmatprep.subr.mxu0 0.0
        %846 = vmatpush1.msra.mxu0 0.0
        %847 = vmatprep.subr.mxu0 0.0
        %848 = vmatpush1.msra.mxu0 0.0
        %849 = vmatprep.subr.mxu0 0.0
        %850 = vmatpush1.msra.mxu0 0.0
        %851 = vmatprep.subr.mxu0 0.0
        %852 = vmatpush1.msra.mxu0 0.0
        %853 = vmatprep.subr.mxu0 0.0
        %854 = vmatpush1.msra.mxu0 0.0
        %855 = vmatprep.subr.mxu0 0.0
        %856 = vmatpush1.msra.mxu0 0.0
        %857 = vmatprep.subr.mxu0 0.0
        %858 = vmatpush1.msra.mxu0 0.0
        %859 = vmatprep.subr.mxu0 0.0
        %860 = vmatpush1.msra.mxu0 0.0
        %861 = vmatprep.subr.mxu0 0.0
        %862 = vmatpush1.msra.mxu0 0.0
        %863 = vmatprep.subr.mxu0 0.0
        %864 = vmatpush1.msra.mxu0 0.0
        %865 = vmatprep.subr.mxu0 0.0
        %866 = vmatpush1.msra.mxu0 0.0
        %867 = vmatprep.mubr.f32.mxu0 0.0
        %868 = vmatmul.mubr.f32.gmra.mrb[0].mxu0 %v801
        %v869 = vpop.f32.mrb[0].mxu0
        %v870 = vadd.f32 %v797, %v869
        %v871 = vpop.f32.mrb[0].mxu0
        %872 = vdwg.mxu0
        %873 = vrot.lane.b32.xlu0 %v414, 112
        %v874 = vpop.permute.xlu0 %873
        %875 = vrot.lane.b32.xlu0 %v414, 80
        %v876 = vpop.permute.xlu0 %875
        %v877 = vsel %vm420, %v874, 0
        %v879 = vsel %vm420, %v876, 0
        %881 = vmatprep.subr.mxu0 0.0
        %882 = vmatpush1.xpose.msra.mxu0 %v879
        %883 = vmatprep.subr.mxu0 0.0
        %884 = vmatpush1.xpose.msra.mxu0 0.0
        %885 = vmatprep.subr.mxu0 0.0
        %886 = vmatpush1.xpose.msra.mxu0 0.0
        %887 = vmatprep.subr.mxu0 0.0
        %888 = vmatpush1.xpose.msra.mxu0 0.0
        %889 = vmatprep.subr.mxu0 0.0
        %890 = vmatpush1.xpose.msra.mxu0 0.0
        %891 = vmatprep.subr.mxu0 0.0
        %892 = vmatpush1.xpose.msra.mxu0 0.0
        %893 = vmatprep.subr.mxu0 0.0
        %894 = vmatpush1.xpose.msra.mxu0 0.0
        %895 = vmatprep.subr.mxu0 0.0
        %896 = vmatpush1.xpose.msra.mxu0 0.0
        %897 = vmatprep.subr.mxu0 0.0
        %898 = vmatpush1.xpose.msra.mxu0 0.0
        %899 = vmatprep.subr.mxu0 0.0
        %900 = vmatpush1.xpose.msra.mxu0 0.0
        %901 = vmatprep.subr.mxu0 0.0
        %902 = vmatpush1.xpose.msra.mxu0 0.0
        %903 = vmatprep.subr.mxu0 0.0
        %904 = vmatpush1.xpose.msra.mxu0 0.0
        %905 = vmatprep.subr.mxu0 0.0
        %906 = vmatpush1.xpose.msra.mxu0 0.0
        %907 = vmatprep.subr.mxu0 0.0
        %908 = vmatpush1.xpose.msra.mxu0 0.0
        %909 = vmatprep.subr.mxu0 0.0
        %910 = vmatpush1.xpose.msra.mxu0 0.0
        %911 = vmatprep.subr.mxu0 0.0
        %912 = vmatpush1.xpose.msra.mxu0 0.0
        %913 = vmatprep.subr.mxu0 0.0
        %914 = vmatpush1.xpose.msra.mxu0 0.0
        %915 = vmatprep.subr.mxu0 0.0
        %916 = vmatpush1.xpose.msra.mxu0 0.0
        %917 = vmatprep.subr.mxu0 0.0
        %918 = vmatpush1.xpose.msra.mxu0 0.0
        %919 = vmatprep.subr.mxu0 0.0
        %920 = vmatpush1.xpose.msra.mxu0 0.0
        %921 = vmatprep.subr.mxu0 0.0
        %922 = vmatpush1.xpose.msra.mxu0 0.0
        %923 = vmatprep.subr.mxu0 0.0
        %924 = vmatpush1.xpose.msra.mxu0 0.0
        %925 = vmatprep.subr.mxu0 0.0
        %926 = vmatpush1.xpose.msra.mxu0 0.0
        %927 = vmatprep.subr.mxu0 0.0
        %928 = vmatpush1.xpose.msra.mxu0 0.0
        %929 = vmatprep.subr.mxu0 0.0
        %930 = vmatpush1.xpose.msra.mxu0 0.0
        %931 = vmatprep.subr.mxu0 0.0
        %932 = vmatpush1.xpose.msra.mxu0 0.0
        %933 = vmatprep.subr.mxu0 0.0
        %934 = vmatpush1.xpose.msra.mxu0 0.0
        %935 = vmatprep.subr.mxu0 0.0
        %936 = vmatpush1.xpose.msra.mxu0 0.0
        %937 = vmatprep.subr.mxu0 0.0
        %938 = vmatpush1.xpose.msra.mxu0 0.0
        %939 = vmatprep.subr.mxu0 0.0
        %940 = vmatpush1.xpose.msra.mxu0 0.0
        %941 = vmatprep.subr.mxu0 0.0
        %942 = vmatpush1.xpose.msra.mxu0 0.0
        %943 = vmatprep.subr.mxu0 0.0
        %944 = vmatpush1.xpose.msra.mxu0 0.0
        %945 = vmatprep.mubr.f32.mxu0 0.0
        %946 = vmatmul.mubr.f32.gmra.mrb[0].mxu0 %v877
        %v947 = vpop.f32.mrb[0].mxu0
        %v948 = vadd.f32 0.0, %v947
        %v949 = vpop.f32.mrb[0].mxu0
        %950 = vdwg.mxu0
        %951 = vrot.lane.b32.xlu0 %v414, 48
        %v952 = vpop.permute.xlu0 %951
        %v955 = vsel %vm420, %v948, 0
        %957 = vmatprep.subr.mxu0 0.0
        %958 = vmatpush1.msra.mxu0 %v952
        %959 = vmatprep.subr.mxu0 0.0
        %960 = vmatpush1.msra.mxu0 0.0
        %961 = vmatprep.subr.mxu0 0.0
        %962 = vmatpush1.msra.mxu0 0.0
        %963 = vmatprep.subr.mxu0 0.0
        %964 = vmatpush1.msra.mxu0 0.0
        %965 = vmatprep.subr.mxu0 0.0
        %966 = vmatpush1.msra.mxu0 0.0
        %967 = vmatprep.subr.mxu0 0.0
        %968 = vmatpush1.msra.mxu0 0.0
        %969 = vmatprep.subr.mxu0 0.0
        %970 = vmatpush1.msra.mxu0 0.0
        %971 = vmatprep.subr.mxu0 0.0
        %972 = vmatpush1.msra.mxu0 0.0
        %973 = vmatprep.subr.mxu0 0.0
        %974 = vmatpush1.msra.mxu0 0.0
        %975 = vmatprep.subr.mxu0 0.0
        %976 = vmatpush1.msra.mxu0 0.0
        %977 = vmatprep.subr.mxu0 0.0
        %978 = vmatpush1.msra.mxu0 0.0
        %979 = vmatprep.subr.mxu0 0.0
        %980 = vmatpush1.msra.mxu0 0.0
        %981 = vmatprep.subr.mxu0 0.0
        %982 = vmatpush1.msra.mxu0 0.0
        %983 = vmatprep.subr.mxu0 0.0
        %984 = vmatpush1.msra.mxu0 0.0
        %985 = vmatprep.subr.mxu0 0.0
        %986 = vmatpush1.msra.mxu0 0.0
        %987 = vmatprep.subr.mxu0 0.0
        %988 = vmatpush1.msra.mxu0 0.0
        %989 = vmatprep.subr.mxu0 0.0
        %990 = vmatpush1.msra.mxu0 0.0
        %991 = vmatprep.subr.mxu0 0.0
        %992 = vmatpush1.msra.mxu0 0.0
        %993 = vmatprep.subr.mxu0 0.0
        %994 = vmatpush1.msra.mxu0 0.0
        %995 = vmatprep.subr.mxu0 0.0
        %996 = vmatpush1.msra.mxu0 0.0
        %997 = vmatprep.subr.mxu0 0.0
        %998 = vmatpush1.msra.mxu0 0.0
        %999 = vmatprep.subr.mxu0 0.0
        %1000 = vmatpush1.msra.mxu0 0.0
        %1001 = vmatprep.subr.mxu0 0.0
        %1002 = vmatpush1.msra.mxu0 0.0
        %1003 = vmatprep.subr.mxu0 0.0
        %1004 = vmatpush1.msra.mxu0 0.0
        %1005 = vmatprep.subr.mxu0 0.0
        %1006 = vmatpush1.msra.mxu0 0.0
        %1007 = vmatprep.subr.mxu0 0.0
        %1008 = vmatpush1.msra.mxu0 0.0
        %1009 = vmatprep.subr.mxu0 0.0
        %1010 = vmatpush1.msra.mxu0 0.0
        %1011 = vmatprep.subr.mxu0 0.0
        %1012 = vmatpush1.msra.mxu0 0.0
        %1013 = vmatprep.subr.mxu0 0.0
        %1014 = vmatpush1.msra.mxu0 0.0
        %1015 = vmatprep.subr.mxu0 0.0
        %1016 = vmatpush1.msra.mxu0 0.0
        %1017 = vmatprep.subr.mxu0 0.0
        %1018 = vmatpush1.msra.mxu0 0.0
        %1019 = vmatprep.subr.mxu0 0.0
        %1020 = vmatpush1.msra.mxu0 0.0
        %1021 = vmatprep.mubr.f32.mxu0 0.0
        %1022 = vmatmul.mubr.f32.gmra.mrb[0].mxu0 %v955
        %v1023 = vpop.f32.mrb[0].mxu0
        %v1024 = vadd.f32 0.0, %v1023
        %v1025 = vpop.f32.mrb[0].mxu0
        %1026 = vdwg.mxu0
        %v1027 = vld [vmem:[#allocation7 + $0x10] sm:$0xff]
        %v1029 = vsel %vm420, %v1024, 0
        %1031 = vmatprep.subr.mxu0 0.0
        %1032 = vmatpush1.msra.mxu0 %v1027
        %1033 = vmatprep.subr.mxu0 0.0
        %1034 = vmatpush1.msra.mxu0 0.0
        %1035 = vmatprep.subr.mxu0 0.0
        %1036 = vmatpush1.msra.mxu0 0.0
        %1037 = vmatprep.subr.mxu0 0.0
        %1038 = vmatpush1.msra.mxu0 0.0
        %1039 = vmatprep.subr.mxu0 0.0
        %1040 = vmatpush1.msra.mxu0 0.0
        %1041 = vmatprep.subr.mxu0 0.0
        %1042 = vmatpush1.msra.mxu0 0.0
        %1043 = vmatprep.subr.mxu0 0.0
        %1044 = vmatpush1.msra.mxu0 0.0
        %1045 = vmatprep.subr.mxu0 0.0
        %1046 = vmatpush1.msra.mxu0 0.0
        %1047 = vmatprep.subr.mxu0 0.0
        %1048 = vmatpush1.msra.mxu0 0.0
        %1049 = vmatprep.subr.mxu0 0.0
        %1050 = vmatpush1.msra.mxu0 0.0
        %1051 = vmatprep.subr.mxu0 0.0
        %1052 = vmatpush1.msra.mxu0 0.0
        %1053 = vmatprep.subr.mxu0 0.0
        %1054 = vmatpush1.msra.mxu0 0.0
        %1055 = vmatprep.subr.mxu0 0.0
        %1056 = vmatpush1.msra.mxu0 0.0
        %1057 = vmatprep.subr.mxu0 0.0
        %1058 = vmatpush1.msra.mxu0 0.0
        %1059 = vmatprep.subr.mxu0 0.0
        %1060 = vmatpush1.msra.mxu0 0.0
        %1061 = vmatprep.subr.mxu0 0.0
        %1062 = vmatpush1.msra.mxu0 0.0
        %1063 = vmatprep.subr.mxu0 0.0
        %1064 = vmatpush1.msra.mxu0 0.0
        %1065 = vmatprep.subr.mxu0 0.0
        %1066 = vmatpush1.msra.mxu0 0.0
        %1067 = vmatprep.subr.mxu0 0.0
        %1068 = vmatpush1.msra.mxu0 0.0
        %1069 = vmatprep.subr.mxu0 0.0
        %1070 = vmatpush1.msra.mxu0 0.0
        %1071 = vmatprep.subr.mxu0 0.0
        %1072 = vmatpush1.msra.mxu0 0.0
        %1073 = vmatprep.subr.mxu0 0.0
        %1074 = vmatpush1.msra.mxu0 0.0
        %1075 = vmatprep.subr.mxu0 0.0
        %1076 = vmatpush1.msra.mxu0 0.0
        %1077 = vmatprep.subr.mxu0 0.0
        %1078 = vmatpush1.msra.mxu0 0.0
        %1079 = vmatprep.subr.mxu0 0.0
        %1080 = vmatpush1.msra.mxu0 0.0
        %1081 = vmatprep.subr.mxu0 0.0
        %1082 = vmatpush1.msra.mxu0 0.0
        %1083 = vmatprep.subr.mxu0 0.0
        %1084 = vmatpush1.msra.mxu0 0.0
        %1085 = vmatprep.subr.mxu0 0.0
        %1086 = vmatpush1.msra.mxu0 0.0
        %1087 = vmatprep.subr.mxu0 0.0
        %1088 = vmatpush1.msra.mxu0 0.0
        %1089 = vmatprep.subr.mxu0 0.0
        %1090 = vmatpush1.msra.mxu0 0.0
        %1091 = vmatprep.subr.mxu0 0.0
        %1092 = vmatpush1.msra.mxu0 0.0
        %1093 = vmatprep.subr.mxu0 0.0
        %1094 = vmatpush1.msra.mxu0 0.0
        %1095 = vmatprep.mubr.f32.mxu0 0.0
        %1096 = vmatmul.mubr.f32.gmra.mrb[0].mxu0 %v1029
        %v1097 = vpop.f32.mrb[0].mxu0
        %v1098 = vadd.f32 0.0, %v1097
        %v1099 = vpop.f32.mrb[0].mxu0
        %1100 = vdwg.mxu0
        %v1101 = vadd.f32 %v870, %v1098
        %1102 = vrot.lane.b32.xlu0 %v414, 104
        %v1103 = vpop.permute.xlu0 %1102
        %1104 = vrot.lane.b32.xlu0 %v414, 72
        %v1105 = vpop.permute.xlu0 %1104
        %v1106 = vsel %vm420, %v1103, 0
        %v1108 = vsel %vm420, %v1105, 0
        %1110 = vmatprep.subr.mxu0 0.0
        %1111 = vmatpush1.xpose.msra.mxu0 %v1108
        %1112 = vmatprep.subr.mxu0 0.0
        %1113 = vmatpush1.xpose.msra.mxu0 0.0
        %1114 = vmatprep.subr.mxu0 0.0
        %1115 = vmatpush1.xpose.msra.mxu0 0.0
        %1116 = vmatprep.subr.mxu0 0.0
        %1117 = vmatpush1.xpose.msra.mxu0 0.0
        %1118 = vmatprep.subr.mxu0 0.0
        %1119 = vmatpush1.xpose.msra.mxu0 0.0
        %1120 = vmatprep.subr.mxu0 0.0
        %1121 = vmatpush1.xpose.msra.mxu0 0.0
        %1122 = vmatprep.subr.mxu0 0.0
        %1123 = vmatpush1.xpose.msra.mxu0 0.0
        %1124 = vmatprep.subr.mxu0 0.0
        %1125 = vmatpush1.xpose.msra.mxu0 0.0
        %1126 = vmatprep.subr.mxu0 0.0
        %1127 = vmatpush1.xpose.msra.mxu0 0.0
        %1128 = vmatprep.subr.mxu0 0.0
        %1129 = vmatpush1.xpose.msra.mxu0 0.0
        %1130 = vmatprep.subr.mxu0 0.0
        %1131 = vmatpush1.xpose.msra.mxu0 0.0
        %1132 = vmatprep.subr.mxu0 0.0
        %1133 = vmatpush1.xpose.msra.mxu0 0.0
        %1134 = vmatprep.subr.mxu0 0.0
        %1135 = vmatpush1.xpose.msra.mxu0 0.0
        %1136 = vmatprep.subr.mxu0 0.0
        %1137 = vmatpush1.xpose.msra.mxu0 0.0
        %1138 = vmatprep.subr.mxu0 0.0
        %1139 = vmatpush1.xpose.msra.mxu0 0.0
        %1140 = vmatprep.subr.mxu0 0.0
        %1141 = vmatpush1.xpose.msra.mxu0 0.0
        %1142 = vmatprep.subr.mxu0 0.0
        %1143 = vmatpush1.xpose.msra.mxu0 0.0
        %1144 = vmatprep.subr.mxu0 0.0
        %1145 = vmatpush1.xpose.msra.mxu0 0.0
        %1146 = vmatprep.subr.mxu0 0.0
        %1147 = vmatpush1.xpose.msra.mxu0 0.0
        %1148 = vmatprep.subr.mxu0 0.0
        %1149 = vmatpush1.xpose.msra.mxu0 0.0
        %1150 = vmatprep.subr.mxu0 0.0
        %1151 = vmatpush1.xpose.msra.mxu0 0.0
        %1152 = vmatprep.subr.mxu0 0.0
        %1153 = vmatpush1.xpose.msra.mxu0 0.0
        %1154 = vmatprep.subr.mxu0 0.0
        %1155 = vmatpush1.xpose.msra.mxu0 0.0
        %1156 = vmatprep.subr.mxu0 0.0
        %1157 = vmatpush1.xpose.msra.mxu0 0.0
        %1158 = vmatprep.subr.mxu0 0.0
        %1159 = vmatpush1.xpose.msra.mxu0 0.0
        %1160 = vmatprep.subr.mxu0 0.0
        %1161 = vmatpush1.xpose.msra.mxu0 0.0
        %1162 = vmatprep.subr.mxu0 0.0
        %1163 = vmatpush1.xpose.msra.mxu0 0.0
        %1164 = vmatprep.subr.mxu0 0.0
        %1165 = vmatpush1.xpose.msra.mxu0 0.0
        %1166 = vmatprep.subr.mxu0 0.0
        %1167 = vmatpush1.xpose.msra.mxu0 0.0
        %1168 = vmatprep.subr.mxu0 0.0
        %1169 = vmatpush1.xpose.msra.mxu0 0.0
        %1170 = vmatprep.subr.mxu0 0.0
        %1171 = vmatpush1.xpose.msra.mxu0 0.0
        %1172 = vmatprep.subr.mxu0 0.0
        %1173 = vmatpush1.xpose.msra.mxu0 0.0
        %1174 = vmatprep.mubr.f32.mxu0 0.0
        %1175 = vmatmul.mubr.f32.gmra.mrb[0].mxu0 %v1106
        %v1176 = vpop.f32.mrb[0].mxu0
        %v1177 = vadd.f32 0.0, %v1176
        %v1178 = vpop.f32.mrb[0].mxu0
        %1179 = vdwg.mxu0
        %1180 = vrot.lane.b32.xlu0 %v414, 40
        %v1181 = vpop.permute.xlu0 %1180
        %v1184 = vsel %vm420, %v1177, 0
        %1186 = vmatprep.subr.mxu0 0.0
        %1187 = vmatpush1.msra.mxu0 %v1181
        %1188 = vmatprep.subr.mxu0 0.0
        %1189 = vmatpush1.msra.mxu0 0.0
        %1190 = vmatprep.subr.mxu0 0.0
        %1191 = vmatpush1.msra.mxu0 0.0
        %1192 = vmatprep.subr.mxu0 0.0
        %1193 = vmatpush1.msra.mxu0 0.0
        %1194 = vmatprep.subr.mxu0 0.0
        %1195 = vmatpush1.msra.mxu0 0.0
        %1196 = vmatprep.subr.mxu0 0.0
        %1197 = vmatpush1.msra.mxu0 0.0
        %1198 = vmatprep.subr.mxu0 0.0
        %1199 = vmatpush1.msra.mxu0 0.0
        %1200 = vmatprep.subr.mxu0 0.0
        %1201 = vmatpush1.msra.mxu0 0.0
        %1202 = vmatprep.subr.mxu0 0.0
        %1203 = vmatpush1.msra.mxu0 0.0
        %1204 = vmatprep.subr.mxu0 0.0
        %1205 = vmatpush1.msra.mxu0 0.0
        %1206 = vmatprep.subr.mxu0 0.0
        %1207 = vmatpush1.msra.mxu0 0.0
        %1208 = vmatprep.subr.mxu0 0.0
        %1209 = vmatpush1.msra.mxu0 0.0
        %1210 = vmatprep.subr.mxu0 0.0
        %1211 = vmatpush1.msra.mxu0 0.0
        %1212 = vmatprep.subr.mxu0 0.0
        %1213 = vmatpush1.msra.mxu0 0.0
        %1214 = vmatprep.subr.mxu0 0.0
        %1215 = vmatpush1.msra.mxu0 0.0
        %1216 = vmatprep.subr.mxu0 0.0
        %1217 = vmatpush1.msra.mxu0 0.0
        %1218 = vmatprep.subr.mxu0 0.0
        %1219 = vmatpush1.msra.mxu0 0.0
        %1220 = vmatprep.subr.mxu0 0.0
        %1221 = vmatpush1.msra.mxu0 0.0
        %1222 = vmatprep.subr.mxu0 0.0
        %1223 = vmatpush1.msra.mxu0 0.0
        %1224 = vmatprep.subr.mxu0 0.0
        %1225 = vmatpush1.msra.mxu0 0.0
        %1226 = vmatprep.subr.mxu0 0.0
        %1227 = vmatpush1.msra.mxu0 0.0
        %1228 = vmatprep.subr.mxu0 0.0
        %1229 = vmatpush1.msra.mxu0 0.0
        %1230 = vmatprep.subr.mxu0 0.0
        %1231 = vmatpush1.msra.mxu0 0.0
        %1232 = vmatprep.subr.mxu0 0.0
        %1233 = vmatpush1.msra.mxu0 0.0
        %1234 = vmatprep.subr.mxu0 0.0
        %1235 = vmatpush1.msra.mxu0 0.0
        %1236 = vmatprep.subr.mxu0 0.0
        %1237 = vmatpush1.msra.mxu0 0.0
        %1238 = vmatprep.subr.mxu0 0.0
        %1239 = vmatpush1.msra.mxu0 0.0
        %1240 = vmatprep.subr.mxu0 0.0
        %1241 = vmatpush1.msra.mxu0 0.0
        %1242 = vmatprep.subr.mxu0 0.0
        %1243 = vmatpush1.msra.mxu0 0.0
        %1244 = vmatprep.subr.mxu0 0.0
        %1245 = vmatpush1.msra.mxu0 0.0
        %1246 = vmatprep.subr.mxu0 0.0
        %1247 = vmatpush1.msra.mxu0 0.0
        %1248 = vmatprep.subr.mxu0 0.0
        %1249 = vmatpush1.msra.mxu0 0.0
        %1250 = vmatprep.mubr.f32.mxu0 0.0
        %1251 = vmatmul.mubr.f32.gmra.mrb[0].mxu0 %v1184
        %v1252 = vpop.f32.mrb[0].mxu0
        %v1253 = vadd.f32 0.0, %v1252
        %v1254 = vpop.f32.mrb[0].mxu0
        %1255 = vdwg.mxu0
        %v1256 = vld [vmem:[#allocation7 + $0x18] sm:$0xff]
        %v1258 = vsel %vm420, %v1253, 0
        %1260 = vmatprep.subr.mxu0 0.0
        %1261 = vmatpush1.msra.mxu0 %v1256
        %1262 = vmatprep.subr.mxu0 0.0
        %1263 = vmatpush1.msra.mxu0 0.0
        %1264 = vmatprep.subr.mxu0 0.0
        %1265 = vmatpush1.msra.mxu0 0.0
        %1266 = vmatprep.subr.mxu0 0.0
        %1267 = vmatpush1.msra.mxu0 0.0
        %1268 = vmatprep.subr.mxu0 0.0
        %1269 = vmatpush1.msra.mxu0 0.0
        %1270 = vmatprep.subr.mxu0 0.0
        %1271 = vmatpush1.msra.mxu0 0.0
        %1272 = vmatprep.subr.mxu0 0.0
        %1273 = vmatpush1.msra.mxu0 0.0
        %1274 = vmatprep.subr.mxu0 0.0
        %1275 = vmatpush1.msra.mxu0 0.0
        %1276 = vmatprep.subr.mxu0 0.0
        %1277 = vmatpush1.msra.mxu0 0.0
        %1278 = vmatprep.subr.mxu0 0.0
        %1279 = vmatpush1.msra.mxu0 0.0
        %1280 = vmatprep.subr.mxu0 0.0
        %1281 = vmatpush1.msra.mxu0 0.0
        %1282 = vmatprep.subr.mxu0 0.0
        %1283 = vmatpush1.msra.mxu0 0.0
        %1284 = vmatprep.subr.mxu0 0.0
        %1285 = vmatpush1.msra.mxu0 0.0
        %1286 = vmatprep.subr.mxu0 0.0
        %1287 = vmatpush1.msra.mxu0 0.0
        %1288 = vmatprep.subr.mxu0 0.0
        %1289 = vmatpush1.msra.mxu0 0.0
        %1290 = vmatprep.subr.mxu0 0.0
        %1291 = vmatpush1.msra.mxu0 0.0
        %1292 = vmatprep.subr.mxu0 0.0
        %1293 = vmatpush1.msra.mxu0 0.0
        %1294 = vmatprep.subr.mxu0 0.0
        %1295 = vmatpush1.msra.mxu0 0.0
        %1296 = vmatprep.subr.mxu0 0.0
        %1297 = vmatpush1.msra.mxu0 0.0
        %1298 = vmatprep.subr.mxu0 0.0
        %1299 = vmatpush1.msra.mxu0 0.0
        %1300 = vmatprep.subr.mxu0 0.0
        %1301 = vmatpush1.msra.mxu0 0.0
        %1302 = vmatprep.subr.mxu0 0.0
        %1303 = vmatpush1.msra.mxu0 0.0
        %1304 = vmatprep.subr.mxu0 0.0
        %1305 = vmatpush1.msra.mxu0 0.0
        %1306 = vmatprep.subr.mxu0 0.0
        %1307 = vmatpush1.msra.mxu0 0.0
        %1308 = vmatprep.subr.mxu0 0.0
        %1309 = vmatpush1.msra.mxu0 0.0
        %1310 = vmatprep.subr.mxu0 0.0
        %1311 = vmatpush1.msra.mxu0 0.0
        %1312 = vmatprep.subr.mxu0 0.0
        %1313 = vmatpush1.msra.mxu0 0.0
        %1314 = vmatprep.subr.mxu0 0.0
        %1315 = vmatpush1.msra.mxu0 0.0
        %1316 = vmatprep.subr.mxu0 0.0
        %1317 = vmatpush1.msra.mxu0 0.0
        %1318 = vmatprep.subr.mxu0 0.0
        %1319 = vmatpush1.msra.mxu0 0.0
        %1320 = vmatprep.subr.mxu0 0.0
        %1321 = vmatpush1.msra.mxu0 0.0
        %1322 = vmatprep.subr.mxu0 0.0
        %1323 = vmatpush1.msra.mxu0 0.0
        %1324 = vmatprep.mubr.f32.mxu0 0.0
        %1325 = vmatmul.mubr.f32.gmra.mrb[0].mxu0 %v1258
        %v1326 = vpop.f32.mrb[0].mxu0
        %v1327 = vadd.f32 0.0, %v1326
        %v1328 = vpop.f32.mrb[0].mxu0
        %1329 = vdwg.mxu0
        %v1330 = vadd.f32 %v1101, %v1327
        %v1331 = vsel %vm343, %v1330, 0.0
        %1332 = vadd.xlane.f32.xlu0 %v1331
        %v1333 = vpop.xlane.xlu0 %1332
        %v1334 = vrcp.pop 32.0
        %v1335 = vmul.f32 %v1333, %v1334
        %v1336 = vsub.f32 %v1330, %v1335
        %v1337 = vmul.f32 %v1336, %v1336
        %v1338 = vsel %vm343, %v1337, 0.0
        %1339 = vadd.xlane.f32.xlu0 %v1338
        %v1340 = vpop.xlane.xlu0 %1339
        %v1341 = vmul.f32 %v1340, %v1334
        %v1342 = vadd.f32 %v1341, 1e-05
        %v1343 = vrsqrt.pop %v1342
        %v1344 = vmul.f32 %v1336, %v1343
        %v1345 = vld [vmem:[%s3] sm:$0x1]
        %v1347 = vlaneseq
        %v1348 = vshrl.u32 %v1347, 7
        %v1349 = vsub.s32 0, %v1348
        %v1350 = vrot.slane %v1345, %v1349
        %v1352 = vmul.f32 %v1344, %v1350
        %v1353 = vld [vmem:[%s4] sm:$0x1]
        %v1355 = vlaneseq
        %v1356 = vshrl.u32 %v1355, 7
        %v1357 = vsub.s32 0, %v1356
        %v1358 = vrot.slane %v1353, %v1357
        %v1360 = vadd.f32 %v1352, %v1358
        %v1361 = vld [vmem:[#allocation8] sm:$0xff]
        %v1362 = vld [vmem:[#allocation8 + $0x8] sm:$0xff]
        %v1363 = vld [vmem:[#allocation8 + $0x10] sm:$0xff]
        %v1364 = vld [vmem:[#allocation8 + $0x18] sm:$0xff]
        %v1365 = vld [vmem:[%s6] sm:$0x1]
        %v1367 = vlaneseq
        %v1368 = vshrl.u32 %v1367, 7
        %v1369 = vsub.s32 0, %v1368
        %v1370 = vrot.slane %v1365, %v1369
        %v1373 = vsel %vm343, %v1360, 0
        %1375 = vmatprep.subr.mxu0 0.0
        %1376 = vmatpush1.msra.mxu0 %v1361
        %1377 = vmatprep.subr.mxu0 0.0
        %1378 = vmatpush1.msra.mxu0 %v1362
        %1379 = vmatprep.subr.mxu0 0.0
        %1380 = vmatpush1.msra.mxu0 %v1363
        %1381 = vmatprep.subr.mxu0 0.0
        %1382 = vmatpush1.msra.mxu0 %v1364
        %1383 = vmatprep.subr.mxu0 0.0
        %1384 = vmatpush1.msra.mxu0 0.0
        %1385 = vmatprep.subr.mxu0 0.0
        %1386 = vmatpush1.msra.mxu0 0.0
        %1387 = vmatprep.subr.mxu0 0.0
        %1388 = vmatpush1.msra.mxu0 0.0
        %1389 = vmatprep.subr.mxu0 0.0
        %1390 = vmatpush1.msra.mxu0 0.0
        %1391 = vmatprep.subr.mxu0 0.0
        %1392 = vmatpush1.msra.mxu0 0.0
        %1393 = vmatprep.subr.mxu0 0.0
        %1394 = vmatpush1.msra.mxu0 0.0
        %1395 = vmatprep.subr.mxu0 0.0
        %1396 = vmatpush1.msra.mxu0 0.0
        %1397 = vmatprep.subr.mxu0 0.0
        %1398 = vmatpush1.msra.mxu0 0.0
        %1399 = vmatprep.subr.mxu0 0.0
        %1400 = vmatpush1.msra.mxu0 0.0
        %1401 = vmatprep.subr.mxu0 0.0
        %1402 = vmatpush1.msra.mxu0 0.0
        %1403 = vmatprep.subr.mxu0 0.0
        %1404 = vmatpush1.msra.mxu0 0.0
        %1405 = vmatprep.subr.mxu0 0.0
        %1406 = vmatpush1.msra.mxu0 0.0
        %1407 = vmatprep.subr.mxu0 0.0
        %1408 = vmatpush1.msra.mxu0 0.0
        %1409 = vmatprep.subr.mxu0 0.0
        %1410 = vmatpush1.msra.mxu0 0.0
        %1411 = vmatprep.subr.mxu0 0.0
        %1412 = vmatpush1.msra.mxu0 0.0
        %1413 = vmatprep.subr.mxu0 0.0
        %1414 = vmatpush1.msra.mxu0 0.0
        %1415 = vmatprep.subr.mxu0 0.0
        %1416 = vmatpush1.msra.mxu0 0.0
        %1417 = vmatprep.subr.mxu0 0.0
        %1418 = vmatpush1.msra.mxu0 0.0
        %1419 = vmatprep.subr.mxu0 0.0
        %1420 = vmatpush1.msra.mxu0 0.0
        %1421 = vmatprep.subr.mxu0 0.0
        %1422 = vmatpush1.msra.mxu0 0.0
        %1423 = vmatprep.subr.mxu0 0.0
        %1424 = vmatpush1.msra.mxu0 0.0
        %1425 = vmatprep.subr.mxu0 0.0
        %1426 = vmatpush1.msra.mxu0 0.0
        %1427 = vmatprep.subr.mxu0 0.0
        %1428 = vmatpush1.msra.mxu0 0.0
        %1429 = vmatprep.subr.mxu0 0.0
        %1430 = vmatpush1.msra.mxu0 0.0
        %1431 = vmatprep.subr.mxu0 0.0
        %1432 = vmatpush1.msra.mxu0 0.0
        %1433 = vmatprep.subr.mxu0 0.0
        %1434 = vmatpush1.msra.mxu0 0.0
        %1435 = vmatprep.subr.mxu0 0.0
        %1436 = vmatpush1.msra.mxu0 0.0
        %1437 = vmatprep.subr.mxu0 0.0
        %1438 = vmatpush1.msra.mxu0 0.0
        %1439 = vmatprep.mubr.f32.mxu0 0.0
        %1440 = vmatmul.mubr.f32.gmra.mrb[0].mxu0 %v1373
        %v1441 = vpop.f32.mrb[0].mxu0
        %v1442 = vadd.f32 %v1370, %v1441
        %v1443 = vpop.f32.mrb[0].mxu0
        %1444 = vdwg.mxu0
        %1445 = vst.msk [vmem:[%s337] sm:$0xff] %vm343, %v1442
        %s1446 = sand.u32 %s186, 1
        %s1447 = scalar_lea.sflag [#allocation4], %s1446
        %s1448 = sand.u32 %s186, 1
        %s1449 = smul.addr %s1448, 8
        %s1450 = scalar_lea.vmem [#allocation10], %s1449
        // Predicated region
        $region65: #{tpu_custom_call.1} parent=47 // pred_check
          %p1451 = pneg %p196
        $region66: #{tpu_custom_call.1} parent=47 // pred_check_branch
          %1453 = sbr.rel (%p1451) target = $region68
        $region67: #{tpu_custom_call.1} parent=47 // pred_region
          %s1455 = ssub.s32 128, 128
          %1456 = vsyncadd %s1447, %s1455
          %s1457 = smul.addr %s26, 128
          %s1458 = scalar_lea.hbm %s7, %s1457
          %s1460 = sshll.u32 %s1450, 4
          %s1461 = int_to_ptr.vmem [resolvable:$true] %s1460
          %1463 = dma.vmem_to_hbm [thread:$0]  %s1461, 128, %s1458, %s1447
        $region68: #{tpu_custom_call.1} parent=47 // pred_fallthru
          _
      $region48: #{tpu_custom_call.1} parent=5 // pred_fallthru
        _
      %p1464 = scmp.le.s32.totalorder 2, %s21
      // Predicated region
      $region69: #{tpu_custom_call.1} parent=5 // pred_check
        %p1465 = pneg %p1464
      $region70: #{tpu_custom_call.1} parent=5 // pred_check_branch
        %1467 = sbr.rel (%p1465) target = $region72
      $region71: #{tpu_custom_call.1} parent=5 // pred_region
        %s1468 = ssub.s32 %s21, 2
        // Predicated region
        $region73: #{tpu_custom_call.1} parent=71 // pred_check
          %p1469 = pneg %p202
        $region74: #{tpu_custom_call.1} parent=71 // pred_check_branch
          %1471 = sbr.rel (%p1469) target = $region76
        $region75: #{tpu_custom_call.1} parent=71 // pred_region
          %s1472 = sand.u32 %s187, 1
          %s1473 = scalar_lea.sflag [#allocation4], %s1472
          %s1474 = sand.u32 %s187, 1
          %s1475 = smul.addr %s1474, 8
          %s1476 = scalar_lea.vmem [#allocation10], %s1475
          %1477 = dma.done %s1473, 128
        $region76: #{tpu_custom_call.1} parent=71 // pred_fallthru
          _
      $region72: #{tpu_custom_call.1} parent=5 // pred_fallthru
        _
    $region6: #{tpu_custom_call.1} parent=1 // loop_footer
      %s25 = sadd.s32 1, %s21
    $region7: #{tpu_custom_call.1} parent=1 // loop_footer_branch
      %20 = sbr.rel target = $region3
    $region8: #{tpu_custom_call.1} parent=1 // loop_exit
      _
    %1478 = vsyncpa [#allocation3], 1
    %s1479 = scalar_lea.sflag [#allocation3], 1
    %1480 = vsyncpa %s1479, 1
    %1481 = vsyncpa [#allocation6], 1
    %1482 = vsyncpa [#allocation9], 1
    %1483 = vsyncpa [#allocation4], 1
    %s1484 = scalar_lea.sflag [#allocation4], 1
    %1485 = vsyncpa %s1484, 1

</llo_original>
